<compile_context>
chip_gen: v5e
topology: v5e:2x2
jax: 0.10.0
libtpu: 0.0.40
codegen_flags: <defaults>
</compile_context>

<pallas_src>
import math

import jax
import jax.numpy as jnp
from jax.experimental import pallas as pl
from jax.experimental.pallas import tpu as pltpu


HEAD_NAMES = ("input_w", "input_b", "input_s",
              "hidden_w", "hidden_b", "hidden_s",
              "last_w", "last_b", "last_s")


def _pad_to(n, m):
    return ((n + m - 1) // m) * m


# ----------------------------------------------------------------------------
# One-time parameter preparation: pack everything into 4 lane-dense constant
# slabs with all layout permutations / bias folds baked in.
# ----------------------------------------------------------------------------
def prepare_params(params, meta_dim, base_dim, dyn_hidden, out_dim, hyper_hidden):
    D, H, O, hh = base_dim, dyn_hidden, out_dim, hyper_hidden
    f32, bf16 = jnp.float32, jnp.bfloat16

    # (1) hyper first layer for all 9 heads: one (meta_dim+1, 9*hh) matrix with
    #     the bias folded in as the last row (pairs with a ones column on meta).
    w1cat = jnp.concatenate([params[n]["w1"].T for n in HEAD_NAMES], axis=1)
    b1cat = jnp.concatenate([params[n]["b1"] for n in HEAD_NAMES])[None, :]
    w1aug = jnp.concatenate([w1cat, b1cat], axis=0).astype(bf16)      # (M+1, 9*hh)

    # (2) hyper second layer: ONE block-diagonal matrix; every head's output
    #     column segment padded up to a 128-lane boundary (aligned slices).
    out_sizes = tuple(int(params[n]["w2"].shape[0]) for n in HEAD_NAMES)
    col_offs, wpad = [], 0
    for s in out_sizes:
        col_offs.append(wpad)
        wpad += _pad_to(s, 128)
    w2blk = jnp.zeros((len(HEAD_NAMES) * hh, wpad), f32)
    b2row = jnp.zeros((1, wpad), f32)
    for i, n in enumerate(HEAD_NAMES):
        s, off = out_sizes[i], col_offs[i]
        w2blk = w2blk.at[i * hh:(i + 1) * hh, off:off + s].set(params[n]["w2"].T)
        b2 = params[n]["b2"]
        if n.endswith("_s"):
            b2 = b2 + 1.0                     # fold "1.0 + scale" into the bias
        b2row = b2row.at[0, off:off + s].set(b2)
    w2blk = w2blk.astype(bf16)

    # (3) 0/1 replicate (T) and segment-sum (S) matrices for the batched
    #     per-sample dynamic net, packed into ONE slab (single DMA).
    #     Row offsets are multiples of 16 (bf16 sublane tile).
    mats = (
        jnp.tile(jnp.eye(D, dtype=f32), (1, H)),                    # T1 (D,   H*D)
        jnp.tile(jnp.eye(H, dtype=f32), (1, H)),                    # T2 (H,   H*H)
        jnp.tile(jnp.eye(H, dtype=f32), (1, O)),                    # T3 (H,   O*H)
        jnp.kron(jnp.eye(H, dtype=f32), jnp.ones((D, 1), f32)),     # S1 (H*D, H)
        jnp.kron(jnp.eye(H, dtype=f32), jnp.ones((H, 1), f32)),     # S2 (H*H, H)
        jnp.kron(jnp.eye(O, dtype=f32), jnp.ones((H, 1), f32)),     # S3 (O*H, O)
    )
    rows = sum(_pad_to(m.shape[0], 16) for m in mats)
    cols = _pad_to(max(m.shape[1] for m in mats), 128)
    cslab = jnp.zeros((rows, cols), f32)
    row_offs, r = [], 0
    for m in mats:
        row_offs.append(r)
        cslab = cslab.at[r:r + m.shape[0], :m.shape[1]].set(m)
        r += _pad_to(m.shape[0], 16)
    cslab = cslab.astype(bf16)

    static = dict(
        dims=(D, H, O, hh, meta_dim),
        col_offs=tuple(col_offs),
        out_sizes=out_sizes,
        row_offs=tuple(row_offs),
        mat_shapes=tuple((int(m.shape[0]), int(m.shape[1])) for m in mats),
    )
    return (w1aug, w2blk, b2row, cslab), static


# ----------------------------------------------------------------------------
# Fused kernel: 9 hyper-heads (2 MXU dots total) + 3-layer dynamic net.
# ----------------------------------------------------------------------------
def _make_kernel(static):
    bf16, f32 = jnp.bfloat16, jnp.float32
    col_offs = static["col_offs"]
    out_sizes = static["out_sizes"]
    (t1o, t2o, t3o, s1o, s2o, s3o) = static["row_offs"]
    (t1s, t2s, t3s, s1s, s2s, s3s) = static["mat_shapes"]

    def kernel(meta_ref, base_ref, w1_ref, w2_ref, b2_ref, cs_ref, o_ref):
        # -- hyper heads, first layer: all 9 heads in ONE MXU dot (bias folded
        #    in via the ones column appended to meta outside the kernel).
        h = jnp.maximum(
            jnp.dot(meta_ref[...].astype(bf16), w1_ref[...],
                    preferred_element_type=f32), 0.0)                # (Bp, 9*hh)

        # -- hyper heads, second layer: ONE block-diagonal MXU dot + bias row.
        gen = jnp.dot(h.astype(bf16), w2_ref[...],
                      preferred_element_type=f32) + b2_ref[...]      # (Bp, Wpad)

        def seg(i):                                # 128-lane-aligned static slice
            off = col_offs[i]
            return gen[:, off:off + out_sizes[i]]

        gw1, gb1, gs1 = seg(0), seg(1), seg(2)
        gw2, gb2, gs2 = seg(3), seg(4), seg(5)
        gw3, gb3, gs3 = seg(6), seg(7), seg(8)

        def cdot(x, roff, shape):                  # dot with a 0/1 constant slice
            rhs = cs_ref[roff:roff + shape[0], 0:shape[1]]
            return jnp.dot(x.astype(bf16), rhs, preferred_element_type=f32)

        # -- dynamic 3-layer net, batched over all padded samples.
        #    raw[b,h] = sum_d genW[b, h*D+d] * x[b,d]
        #             = ((genW * (x @ T)) @ S)[b,h]   with constant 0/1 T and S.
        raw1 = cdot(gw1 * cdot(base_ref[...], t1o, t1s), s1o, s1s)    # (Bp, H)
        a1 = jnp.maximum(raw1 * gs1 + gb1, 0.0)

        raw2 = cdot(gw2 * cdot(a1, t2o, t2s), s2o, s2s)               # (Bp, H)
        a2 = jnp.maximum(raw2 * gs2 + gb2, 0.0)

        raw3 = cdot(gw3 * cdot(a2, t3o, t3s), s3o, s3s)               # (Bp, O)
        o_ref[...] = (raw3 * gs3 + gb3).astype(o_ref.dtype)

    return kernel


# ----------------------------------------------------------------------------
# Forward (single pallas_call, no grid — everything fits in VMEM).
# ----------------------------------------------------------------------------
def hypernet_forward(prep, static, meta_v, base_v):
    w1aug, w2blk, b2row, cslab = prep
    D, H, O, hh, M = static["dims"]
    B = meta_v.shape[0]
    Bp = max(8, _pad_to(B, 8))                    # pad batch to a sublane tile

    meta_p = jnp.pad(meta_v.astype(jnp.float32), ((0, Bp - B), (0, 0)))
    base_p = jnp.pad(base_v.astype(jnp.float32), ((0, Bp - B), (0, 0)))
    meta_aug = jnp.concatenate(
        [meta_p, jnp.ones((Bp, 1), jnp.float32)], axis=1)            # bias column

    args = (meta_aug, base_p, w1aug, w2blk, b2row, cslab)

    wpad = w2blk.shape[1]
    flops = 2 * Bp * ((M + 1) * 9 * hh + 9 * hh * wpad
                      + D * (H * D) + H * (H * H) + H * (O * H)
                      + (H * D) * H + (H * H) * H + (O * H) * O)
    bytes_accessed = sum(int(a.size) * a.dtype.itemsize for a in args) + Bp * O * 4
    cost = pl.CostEstimate(flops=int(flops), transcendentals=0,
                           bytes_accessed=int(bytes_accessed))

    vmem = pl.BlockSpec(memory_space=pltpu.MemorySpace.VMEM)
    out = pl.pallas_call(
        _make_kernel(static),
        out_shape=jax.ShapeDtypeStruct((Bp, O), jnp.float32),
        in_specs=[vmem] * len(args),
        out_specs=vmem,
        cost_estimate=cost,
    )(*args)
    return out[:B]


# ----------------------------------------------------------------------------
# Parameter init (matches the module's init_layers scheme, deterministic).
# ----------------------------------------------------------------------------
def _init_linear(key, out_f, in_f):
    kw, kb = jax.random.split(key)
    bw = 1.0 / math.sqrt(2.0 * in_f)              # init_layers override (weights)
    bb = 1.0 / math.sqrt(in_f)                    # PyTorch default bias init
    w = jax.random.uniform(kw, (out_f, in_f), jnp.float32, -bw, bw)
    b = jax.random.uniform(kb, (out_f,), jnp.float32, -bb, bb)
    return w, b


def _init_head(key, meta_dim, hyper_hidden, out_dim):
    k1, k2 = jax.random.split(key)
    w1, b1 = _init_linear(k1, hyper_hidden, meta_dim)
    w2, b2 = _init_linear(k2, out_dim, hyper_hidden)
    return {"w1": w1, "b1": b1, "w2": w2, "b2": b2}


def init_params(key, meta_dim, base_dim, out_dim, hyper_hidden, dyn_hidden):
    sizes = {
        "input_w": base_dim * dyn_hidden, "input_b": dyn_hidden, "input_s": dyn_hidden,
        "hidden_w": dyn_hidden * dyn_hidden, "hidden_b": dyn_hidden, "hidden_s": dyn_hidden,
        "last_w": dyn_hidden * out_dim, "last_b": out_dim, "last_s": out_dim,
    }
    keys = jax.random.split(key, len(HEAD_NAMES))
    return {name: _init_head(k, meta_dim, hyper_hidden, sizes[name])
            for name, k in zip(HEAD_NAMES, keys)}


# ----------------------------------------------------------------------------
# Pure-JAX reference (mirrors the PyTorch forward exactly) for verification.
# ----------------------------------------------------------------------------
def reference_forward(params, meta_v, base_v, dyn_hidden, out_dim):
    B = meta_v.shape[0]
    H, O = dyn_hidden, out_dim

    def head(name):
        p = params[name]
        h = jnp.maximum(meta_v @ p["w1"].T + p["b1"], 0.0)
        return h @ p["w2"].T + p["b2"]

    w1 = head("input_w").reshape(B, H, -1)
    b1 = head("input_b").reshape(B, H, 1)
    s1 = 1.0 + head("input_s").reshape(B, H, 1)
    w2 = head("hidden_w").reshape(B, H, H)
    b2 = head("hidden_b").reshape(B, H, 1)
    s2 = 1.0 + head("hidden_s").reshape(B, H, 1)
    w3 = head("last_w").reshape(B, O, H)
    b3 = head("last_b").reshape(B, O, 1)
    s3 = 1.0 + head("last_s").reshape(B, O, 1)

    x = base_v[:, :, None]                                   # (B, D, 1)
    out = jnp.maximum(jnp.einsum("bhd,bdk->bhk", w1, x) * s1 + b1, 0.0)
    out = jnp.maximum(jnp.einsum("bhj,bjk->bhk", w2, out) * s2 + b2, 0.0)
    out = jnp.einsum("boh,bhk->bok", w3, out) * s3 + b3
    return out[:, :, 0]


# ----------------------------------------------------------------------------
if __name__ == "__main__":
    # Small shapes consistent with the module's forward.
    B = 2               # batch
    META_DIM = 8        # meta_v_dim
    BASE_DIM = 8        # base_v_dim
    OUT_DIM = 4         # output_dim
    HYPER_HIDDEN = 32   # hyper_hidden_dim
    DYN_HIDDEN = 16     # dynamic_hidden_dim

    key = jax.random.PRNGKey(0)
    kp, km, kb = jax.random.split(key, 3)

    params = init_params(kp, META_DIM, BASE_DIM, OUT_DIM, HYPER_HIDDEN, DYN_HIDDEN)
    meta_v = jax.random.normal(km, (B, META_DIM), jnp.float32)
    base_v = jax.random.normal(kb, (B, BASE_DIM), jnp.float32)

    # One-time layout prep (outside the hot path).
    prep, static = prepare_params(params, META_DIM, BASE_DIM, DYN_HIDDEN, OUT_DIM,
                                  HYPER_HIDDEN)

    fwd = jax.jit(lambda pr, m, x: hypernet_forward(pr, static, m, x))
    out = jax.block_until_ready(fwd(prep, meta_v, base_v))

    ref = reference_forward(params, meta_v, base_v, DYN_HIDDEN, OUT_DIM)
    assert out.shape == (B, OUT_DIM), out.shape
    max_diff = float(jnp.max(jnp.abs(out - ref)))
    # bf16 MXU arithmetic (DEFAULT matmul precision on TPU) bounds the diff.
    assert jnp.allclose(out, ref, atol=5e-3, rtol=5e-3), f"max abs diff {max_diff}"

    print("KERNEL_OK")
</pallas_src>

<mosaic_0001>
module attributes {stable_mosaic.version = 11 : i64} {
  func.func @kernel(%arg0: memref<8x9xf32, #tpu.memory_space<vmem>>, %arg1: memref<8x8xf32, #tpu.memory_space<vmem>>, %arg2: memref<9x288xbf16, #tpu.memory_space<vmem>>, %arg3: memref<288x1280xbf16, #tpu.memory_space<vmem>>, %arg4: memref<1x1280xf32, #tpu.memory_space<vmem>>, %arg5: memref<496x256xbf16, #tpu.memory_space<vmem>>, %arg6: memref<8x4xf32, #tpu.memory_space<vmem>>) attributes {dimension_semantics = [], scalar_prefetch = 0 : i64, scratch_operands = 0 : i64, tpu.core_type = #tpu.core_type<tc>} {
    %c0 = arith.constant 0 : index
    %c0_0 = arith.constant 0 : index
    %0 = vector.load %arg0[%c0, %c0_0] : memref<8x9xf32, #tpu.memory_space<vmem>>, vector<8x9xf32>
    %1 = arith.truncf %0 : vector<8x9xf32> to vector<8x9xbf16>
    %c0_1 = arith.constant 0 : index
    %c0_2 = arith.constant 0 : index
    %2 = vector.load %arg2[%c0_1, %c0_2] : memref<9x288xbf16, #tpu.memory_space<vmem>>, vector<9x288xbf16>
    %cst = arith.constant dense<0.000000e+00> : vector<8x288xf32>
    %3 = tpu.matmul %1, %2, %cst {dimension_numbers = #tpu.dot_dimension_numbers<[1], [0], [0], [1], [0, 0, 1, 1], [], []>} : vector<8x9xbf16>, vector<9x288xbf16>, vector<8x288xf32> -> vector<8x288xf32>
    %cst_3 = arith.constant 0.000000e+00 : f32
    %4 = vector.broadcast %cst_3 : f32 to vector<8x288xf32>
    %5 = arith.maximumf %3, %4 : vector<8x288xf32>
    %6 = arith.truncf %5 : vector<8x288xf32> to vector<8x288xbf16>
    %c0_4 = arith.constant 0 : index
    %c0_5 = arith.constant 0 : index
    %7 = vector.load %arg3[%c0_4, %c0_5] : memref<288x1280xbf16, #tpu.memory_space<vmem>>, vector<288x1280xbf16>
    %cst_6 = arith.constant dense<0.000000e+00> : vector<8x1280xf32>
    %8 = tpu.matmul %6, %7, %cst_6 {dimension_numbers = #tpu.dot_dimension_numbers<[1], [0], [0], [1], [0, 0, 1, 1], [], []>} : vector<8x288xbf16>, vector<288x1280xbf16>, vector<8x1280xf32> -> vector<8x1280xf32>
    %c0_7 = arith.constant 0 : index
    %c0_8 = arith.constant 0 : index
    %9 = vector.load %arg4[%c0_7, %c0_8] : memref<1x1280xf32, #tpu.memory_space<vmem>>, vector<1x1280xf32>
    %10 = vector.broadcast %9 : vector<1x1280xf32> to vector<8x1280xf32>
    %11 = arith.addf %8, %10 : vector<8x1280xf32>
    %12 = vector.extract_strided_slice %11 {offsets = [0, 0], sizes = [8, 128], strides = [1, 1]} : vector<8x1280xf32> to vector<8x128xf32>
    %13 = vector.extract_strided_slice %11 {offsets = [0, 128], sizes = [8, 16], strides = [1, 1]} : vector<8x1280xf32> to vector<8x16xf32>
    %14 = vector.extract_strided_slice %11 {offsets = [0, 256], sizes = [8, 16], strides = [1, 1]} : vector<8x1280xf32> to vector<8x16xf32>
    %15 = vector.extract_strided_slice %11 {offsets = [0, 384], sizes = [8, 256], strides = [1, 1]} : vector<8x1280xf32> to vector<8x256xf32>
    %16 = vector.extract_strided_slice %11 {offsets = [0, 640], sizes = [8, 16], strides = [1, 1]} : vector<8x1280xf32> to vector<8x16xf32>
    %17 = vector.extract_strided_slice %11 {offsets = [0, 768], sizes = [8, 16], strides = [1, 1]} : vector<8x1280xf32> to vector<8x16xf32>
    %18 = vector.extract_strided_slice %11 {offsets = [0, 896], sizes = [8, 64], strides = [1, 1]} : vector<8x1280xf32> to vector<8x64xf32>
    %19 = vector.extract_strided_slice %11 {offsets = [0, 1024], sizes = [8, 4], strides = [1, 1]} : vector<8x1280xf32> to vector<8x4xf32>
    %20 = vector.extract_strided_slice %11 {offsets = [0, 1152], sizes = [8, 4], strides = [1, 1]} : vector<8x1280xf32> to vector<8x4xf32>
    %c0_9 = arith.constant 0 : index
    %c0_10 = arith.constant 0 : index
    %21 = vector.load %arg1[%c0_9, %c0_10] : memref<8x8xf32, #tpu.memory_space<vmem>>, vector<8x8xf32>
    %c0_11 = arith.constant 0 : index
    %c0_12 = arith.constant 0 : index
    %22 = vector.load %arg5[%c0_11, %c0_12] : memref<496x256xbf16, #tpu.memory_space<vmem>>, vector<8x128xbf16>
    %23 = arith.truncf %21 : vector<8x8xf32> to vector<8x8xbf16>
    %cst_13 = arith.constant dense<0.000000e+00> : vector<8x128xf32>
    %24 = tpu.matmul %23, %22, %cst_13 {dimension_numbers = #tpu.dot_dimension_numbers<[1], [0], [0], [1], [0, 0, 1, 1], [], []>} : vector<8x8xbf16>, vector<8x128xbf16>, vector<8x128xf32> -> vector<8x128xf32>
    %25 = arith.mulf %12, %24 : vector<8x128xf32>
    %c48 = arith.constant 48 : index
    %c0_14 = arith.constant 0 : index
    %26 = vector.load %arg5[%c48, %c0_14] : memref<496x256xbf16, #tpu.memory_space<vmem>>, vector<128x16xbf16>
    %27 = arith.truncf %25 : vector<8x128xf32> to vector<8x128xbf16>
    %cst_15 = arith.constant dense<0.000000e+00> : vector<8x16xf32>
    %28 = tpu.matmul %27, %26, %cst_15 {dimension_numbers = #tpu.dot_dimension_numbers<[1], [0], [0], [1], [0, 0, 1, 1], [], []>} : vector<8x128xbf16>, vector<128x16xbf16>, vector<8x16xf32> -> vector<8x16xf32>
    %29 = arith.mulf %28, %14 : vector<8x16xf32>
    %30 = arith.addf %29, %13 : vector<8x16xf32>
    %cst_16 = arith.constant 0.000000e+00 : f32
    %31 = vector.broadcast %cst_16 : f32 to vector<8x16xf32>
    %32 = arith.maximumf %30, %31 : vector<8x16xf32>
    %c16 = arith.constant 16 : index
    %c0_17 = arith.constant 0 : index
    %33 = vector.load %arg5[%c16, %c0_17] : memref<496x256xbf16, #tpu.memory_space<vmem>>, vector<16x256xbf16>
    %34 = arith.truncf %32 : vector<8x16xf32> to vector<8x16xbf16>
    %cst_18 = arith.constant dense<0.000000e+00> : vector<8x256xf32>
    %35 = tpu.matmul %34, %33, %cst_18 {dimension_numbers = #tpu.dot_dimension_numbers<[1], [0], [0], [1], [0, 0, 1, 1], [], []>} : vector<8x16xbf16>, vector<16x256xbf16>, vector<8x256xf32> -> vector<8x256xf32>
    %36 = arith.mulf %15, %35 : vector<8x256xf32>
    %c176 = arith.constant 176 : index
    %c0_19 = arith.constant 0 : index
    %37 = vector.load %arg5[%c176, %c0_19] : memref<496x256xbf16, #tpu.memory_space<vmem>>, vector<256x16xbf16>
    %38 = arith.truncf %36 : vector<8x256xf32> to vector<8x256xbf16>
    %cst_20 = arith.constant dense<0.000000e+00> : vector<8x16xf32>
    %39 = tpu.matmul %38, %37, %cst_20 {dimension_numbers = #tpu.dot_dimension_numbers<[1], [0], [0], [1], [0, 0, 1, 1], [], []>} : vector<8x256xbf16>, vector<256x16xbf16>, vector<8x16xf32> -> vector<8x16xf32>
    %40 = arith.mulf %39, %17 : vector<8x16xf32>
    %41 = arith.addf %40, %16 : vector<8x16xf32>
    %cst_21 = arith.constant 0.000000e+00 : f32
    %42 = vector.broadcast %cst_21 : f32 to vector<8x16xf32>
    %43 = arith.maximumf %41, %42 : vector<8x16xf32>
    %c32 = arith.constant 32 : index
    %c0_22 = arith.constant 0 : index
    %44 = vector.load %arg5[%c32, %c0_22] : memref<496x256xbf16, #tpu.memory_space<vmem>>, vector<16x64xbf16>
    %45 = arith.truncf %43 : vector<8x16xf32> to vector<8x16xbf16>
    %cst_23 = arith.constant dense<0.000000e+00> : vector<8x64xf32>
    %46 = tpu.matmul %45, %44, %cst_23 {dimension_numbers = #tpu.dot_dimension_numbers<[1], [0], [0], [1], [0, 0, 1, 1], [], []>} : vector<8x16xbf16>, vector<16x64xbf16>, vector<8x64xf32> -> vector<8x64xf32>
    %47 = arith.mulf %18, %46 : vector<8x64xf32>
    %c432 = arith.constant 432 : index
    %c0_24 = arith.constant 0 : index
    %48 = vector.load %arg5[%c432, %c0_24] : memref<496x256xbf16, #tpu.memory_space<vmem>>, vector<64x4xbf16>
    %49 = arith.truncf %47 : vector<8x64xf32> to vector<8x64xbf16>
    %cst_25 = arith.constant dense<0.000000e+00> : vector<8x4xf32>
    %50 = tpu.matmul %49, %48, %cst_25 {dimension_numbers = #tpu.dot_dimension_numbers<[1], [0], [0], [1], [0, 0, 1, 1], [], []>} : vector<8x64xbf16>, vector<64x4xbf16>, vector<8x4xf32> -> vector<8x4xf32>
    %51 = arith.mulf %50, %20 : vector<8x4xf32>
    %52 = arith.addf %51, %19 : vector<8x4xf32>
    %c0_26 = arith.constant 0 : index
    %c0_27 = arith.constant 0 : index
    %53 = vector.load %arg6[%c0_26, %c0_27] : memref<8x4xf32, #tpu.memory_space<vmem>>, vector<8x4xf32>
    tpu.vector_store %arg6[%c0_26, %c0_27], %52 {strides = array<i32>} : memref<8x4xf32, #tpu.memory_space<vmem>>, vector<8x4xf32>,
    return
  }
}

</mosaic_0001>

<llo_original>
// kernel: _lambda_.1
$region0: #{_lambda_.1}
  #allocation0 [shape = 'u32[]', space=smem, size = 0x4, offset = 0x4, fixed_abs, tag = 'smem constant byte address 0x4 - core index']
  #allocation1 [shape = 'u32[72,128]{1,0:T(1,128)}', space=vmem, size = 0x9000, scoped, tag = 'internal scratch']
  %s0 = inlined_call_operand.vmem [shape: f32[8,9], index: 0, kind: input, shape index: {}]
  %s1 = inlined_call_operand.vmem [shape: f32[8,8], index: 1, kind: input, shape index: {}]
  %s2 = inlined_call_operand.hbm [shape: bf16[9,288], index: 2, kind: input, shape index: {}]
  %s3 = inlined_call_operand.hbm [shape: bf16[288,1280], index: 3, kind: input, shape index: {}]
  %s4 = inlined_call_operand.vmem [shape: f32[1,1280], index: 4, kind: input, shape index: {}]
  %s5 = inlined_call_operand.hbm [shape: bf16[496,256], index: 5, kind: input, shape index: {}]
  %s6 = inlined_call_operand.vmem [shape: f32[8,4], index: 6, kind: output, shape index: {}]
  %s7 = sld [smem:[#allocation0]]
  $region46: #{_lambda_.1} parent=0
    _
  %s9 = ssub.s32 1, %s7
  %s10 = scalar_select 0, %s9, %s7
  $region1: #{_lambda_.1} parent=0
    #allocation2 [shape = 'u8[12288]{0}', space=vmem, size = 0x3000, scoped, tag = 'input window, operand 2, single buffered']
    #allocation3 [shape = 's32[1]{0}', space=sflag, size = 0x4, scoped, tag = 'scoped memory for _lambda_.1']
    #allocation4 [shape = 'u8[737280]{0}', space=vmem, size = 0xb4000, scoped, tag = 'input window, operand 3, single buffered']
    #allocation5 [shape = 's32[1]{0}', space=sflag, size = 0x4, scoped, tag = 'scoped memory for _lambda_.1']
    #allocation6 [shape = 'u8[253952]{0}', space=vmem, size = 0x3e000, scoped, tag = 'input window, operand 5, single buffered']
    %11 = vsyncpa [#allocation3], 0
    %12 = vsyncpa [#allocation5], 0
    // Predicated region
    $region2: #{_lambda_.1} parent=1 // pred_check
      _
    $region3: #{_lambda_.1} parent=1 // pred_check_branch
      %14 = sbr.rel (0) target = $region5
    $region4: #{_lambda_.1} parent=1 // pred_region
      _
    $region5: #{_lambda_.1} parent=1 // pred_fallthru
      _
    // Predicated region
    $region6: #{_lambda_.1} parent=1 // pred_check
      _
    $region7: #{_lambda_.1} parent=1 // pred_check_branch
      %16 = sbr.rel (0) target = $region9
    $region8: #{_lambda_.1} parent=1 // pred_region
      _
    $region9: #{_lambda_.1} parent=1 // pred_fallthru
      _
    // Predicated region
    $region10: #{_lambda_.1} parent=1 // pred_check
      _
    $region11: #{_lambda_.1} parent=1 // pred_check_branch
      %18 = sbr.rel (0) target = $region13
    $region12: #{_lambda_.1} parent=1 // pred_region
      %20 = vsyncadd [#allocation3], 0
      %s21 = sshll.u32 %s2, 4
      %s22 = int_to_ptr.hbm [resolvable:$true] %s21
      %s23 = sshll.u32 [#allocation2], 4
      %s24 = int_to_ptr.vmem [resolvable:$true] %s23
      %29 = dma.hbm_to_vmem [thread:$0]  %s22, 384, %s24, [#allocation3], 192, 192, 12
    $region13: #{_lambda_.1} parent=1 // pred_fallthru
      _
    // Predicated region
    $region14: #{_lambda_.1} parent=1 // pred_check
      _
    $region15: #{_lambda_.1} parent=1 // pred_check_branch
      %31 = sbr.rel (0) target = $region17
    $region16: #{_lambda_.1} parent=1 // pred_region
      %33 = vsyncadd [#allocation5], 0
      %s34 = sshll.u32 %s3, 4
      %s35 = int_to_ptr.hbm [resolvable:$true] %s34
      %s36 = sshll.u32 [#allocation4], 4
      %s37 = int_to_ptr.vmem [resolvable:$true] %s36
      %42 = dma.hbm_to_vmem [thread:$0]  %s35, 23040, %s37, [#allocation5], 640, 640, 40
    $region17: #{_lambda_.1} parent=1 // pred_fallthru
      _
    // Predicated region
    $region18: #{_lambda_.1} parent=1 // pred_check
      _
    $region19: #{_lambda_.1} parent=1 // pred_check_branch
      %44 = sbr.rel (0) target = $region21
    $region20: #{_lambda_.1} parent=1 // pred_region
      _
    $region21: #{_lambda_.1} parent=1 // pred_fallthru
      _
    // Predicated region
    $region22: #{_lambda_.1} parent=1 // pred_check
      _
    $region23: #{_lambda_.1} parent=1 // pred_check_branch
      %46 = sbr.rel (0) target = $region25
    $region24: #{_lambda_.1} parent=1 // pred_region
      %48 = vsyncadd [#allocation5], 0
      %s49 = sshll.u32 %s5, 4
      %s50 = int_to_ptr.hbm [resolvable:$true] %s49
      %s51 = sshll.u32 [#allocation6], 4
      %s52 = int_to_ptr.vmem [resolvable:$true] %s51
      %57 = dma.hbm_to_vmem [thread:$0]  %s50, 7936, %s52, [#allocation5], 128, 128, 8
    $region25: #{_lambda_.1} parent=1 // pred_fallthru
      _
    // Predicated region
    $region26: #{_lambda_.1} parent=1 // pred_check
      _
    $region27: #{_lambda_.1} parent=1 // pred_check_branch
      %59 = sbr.rel (0) target = $region29
    $region28: #{_lambda_.1} parent=1 // pred_region
      %61 = dma.done [#allocation3], 384
    $region29: #{_lambda_.1} parent=1 // pred_fallthru
      _
    // Predicated region
    $region30: #{_lambda_.1} parent=1 // pred_check
      _
    $region31: #{_lambda_.1} parent=1 // pred_check_branch
      %63 = sbr.rel (0) target = $region33
    $region32: #{_lambda_.1} parent=1 // pred_region
      %65 = dma.done [#allocation5], 23040
    $region33: #{_lambda_.1} parent=1 // pred_fallthru
      _
    // Predicated region
    $region34: #{_lambda_.1} parent=1 // pred_check
      _
    $region35: #{_lambda_.1} parent=1 // pred_check_branch
      %67 = sbr.rel (0) target = $region37
    $region36: #{_lambda_.1} parent=1 // pred_region
      %69 = dma.done [#allocation5], 7936
    $region37: #{_lambda_.1} parent=1 // pred_fallthru
      _
    %v71 = vld [vmem:[%s0] sm:$0xff]
    %v72 = vpack.c.bf16 %v71, %v71
    %v73 = vld [vmem:[#allocation2] sm:$0xff]
    %v74 = vld [vmem:[#allocation2 + $0x8] sm:$0xf]
    %v75 = vld [vmem:[#allocation2 + $0xc] sm:$0x11]
    %v76 = vld [vmem:[#allocation2 + $0x14] sm:$0x1]
    %v81 = vunpack.c.l.b16 %v73
    %v82 = vunpack.c.h.b16 %v73
    %v83 = vunpack.c.l.b16 %v74
    %v84 = vunpack.c.l.b16 %v75
    %v85 = vunpack.c.h.b16 %v75
    %v86 = vunpack.c.l.b16 %v76
    %v87 = vpack.c.b16 %v84, %v81
    %v88 = vpack.c.b16 %v85, %v82
    %v89 = vpack.c.b16 %v86, %v83
    %vm90 = vcmask 72704
    %v92 = vsel %vm90, %v72, 0
    %vm94 = vcmask 1043456
    %vm95 = vcmask 1044480
    %v96 = vsel %vm94, 4294967295, 65535
    %v97 = vsel %vm95, %v96, 0
    %v99 = vand.u32 %v87, %v97
    %v102 = vand.u32 %v88, %v97
    %v105 = vand.u32 %v89, %v97
    %107 = vmatpush.bf16.msra.mxu0 0
    %108 = vmatpush.bf16.msra.mxu0 0
    %109 = vmatpush.bf16.msra.mxu0 0
    %110 = vmatpush.bf16.msra.mxu0 0
    %111 = vmatpush.bf16.msra.mxu0 0
    %112 = vmatpush.bf16.msra.mxu0 0
    %113 = vmatpush.bf16.msra.mxu0 0
    %114 = vmatpush.bf16.msra.mxu0 %v99
    %115 = vmatmul.bf16.gmra.mxu0 %v92
    %v116 = vpop.f32.mrf.mxu0
    %v117 = vadd.f32 0.0, %v116
    %v118 = vpop.f32.mrf.mxu0
    %119 = vdwg.mxu0
    %120 = vmatpush.bf16.msra.mxu0 0
    %121 = vmatpush.bf16.msra.mxu0 0
    %122 = vmatpush.bf16.msra.mxu0 0
    %123 = vmatpush.bf16.msra.mxu0 0
    %124 = vmatpush.bf16.msra.mxu0 0
    %125 = vmatpush.bf16.msra.mxu0 0
    %126 = vmatpush.bf16.msra.mxu0 0
    %127 = vmatpush.bf16.msra.mxu0 %v102
    %128 = vmatmul.bf16.gmra.mxu0 %v92
    %v129 = vpop.f32.mrf.mxu0
    %v130 = vadd.f32 0.0, %v129
    %v131 = vpop.f32.mrf.mxu0
    %132 = vdwg.mxu0
    %133 = vmatpush.bf16.msra.mxu0 0
    %134 = vmatpush.bf16.msra.mxu0 0
    %135 = vmatpush.bf16.msra.mxu0 0
    %136 = vmatpush.bf16.msra.mxu0 0
    %137 = vmatpush.bf16.msra.mxu0 0
    %138 = vmatpush.bf16.msra.mxu0 0
    %139 = vmatpush.bf16.msra.mxu0 0
    %140 = vmatpush.bf16.msra.mxu0 %v105
    %141 = vmatmul.bf16.gmra.mxu0 %v92
    %v142 = vpop.f32.mrf.mxu0
    %v143 = vadd.f32 0.0, %v142
    %v144 = vpop.f32.mrf.mxu0
    %145 = vdwg.mxu0
    %v146 = vmax.f32 %v117, 0.0
    %v147 = vmax.f32 %v130, 0.0
    %v148 = vmax.f32 %v143, 0.0
    %v149 = vpack.c.bf16 %v146, %v146
    %v150 = vpack.c.bf16 %v147, %v147
    %v151 = vpack.c.bf16 %v148, %v148
    %v152 = vld [vmem:[#allocation4] sm:$0xff]
    %v153 = vld [vmem:[#allocation4 + $0x8] sm:$0xff]
    %v154 = vld [vmem:[#allocation4 + $0x10] sm:$0xff]
    %v155 = vld [vmem:[#allocation4 + $0x18] sm:$0xff]
    %v156 = vld [vmem:[#allocation4 + $0x20] sm:$0xff]
    %v157 = vld [vmem:[#allocation4 + $0x28] sm:$0xff]
    %v158 = vld [vmem:[#allocation4 + $0x30] sm:$0xff]
    %v159 = vld [vmem:[#allocation4 + $0x38] sm:$0xff]
    %v160 = vld [vmem:[#allocation4 + $0x40] sm:$0xff]
    %v161 = vld [vmem:[#allocation4 + $0x48] sm:$0xff]
    %v162 = vld [vmem:[#allocation4 + $0x50] sm:$0xff]
    %v163 = vld [vmem:[#allocation4 + $0x58] sm:$0xff]
    %v164 = vld [vmem:[#allocation4 + $0x60] sm:$0xff]
    %v165 = vld [vmem:[#allocation4 + $0x68] sm:$0xff]
    %v166 = vld [vmem:[#allocation4 + $0x70] sm:$0xff]
    %v167 = vld [vmem:[#allocation4 + $0x78] sm:$0xff]
    %v168 = vld [vmem:[#allocation4 + $0x80] sm:$0xff]
    %v169 = vld [vmem:[#allocation4 + $0x88] sm:$0xff]
    %v170 = vld [vmem:[#allocation4 + $0x90] sm:$0xff]
    %v171 = vld [vmem:[#allocation4 + $0x98] sm:$0xff]
    %v172 = vld [vmem:[#allocation4 + $0xa0] sm:$0xff]
    %v173 = vld [vmem:[#allocation4 + $0xa8] sm:$0xff]
    %v174 = vld [vmem:[#allocation4 + $0xb0] sm:$0xff]
    %v175 = vld [vmem:[#allocation4 + $0xb8] sm:$0xff]
    %v176 = vld [vmem:[#allocation4 + $0xc0] sm:$0xff]
    %v177 = vld [vmem:[#allocation4 + $0xc8] sm:$0xff]
    %v178 = vld [vmem:[#allocation4 + $0xd0] sm:$0xff]
    %v179 = vld [vmem:[#allocation4 + $0xd8] sm:$0xff]
    %v180 = vld [vmem:[#allocation4 + $0xe0] sm:$0xff]
    %v181 = vld [vmem:[#allocation4 + $0xe8] sm:$0xff]
    %v182 = vld [vmem:[#allocation4 + $0xf0] sm:$0xff]
    %v183 = vld [vmem:[#allocation4 + $0xf8] sm:$0xff]
    %v184 = vld [vmem:[#allocation4 + $0x100] sm:$0xff]
    %v185 = vld [vmem:[#allocation4 + $0x108] sm:$0xff]
    %v186 = vld [vmem:[#allocation4 + $0x110] sm:$0xff]
    %v187 = vld [vmem:[#allocation4 + $0x118] sm:$0xff]
    %v188 = vld [vmem:[#allocation4 + $0x120] sm:$0xff]
    %v189 = vld [vmem:[#allocation4 + $0x128] sm:$0xff]
    %v190 = vld [vmem:[#allocation4 + $0x130] sm:$0xff]
    %v191 = vld [vmem:[#allocation4 + $0x138] sm:$0xff]
    %v192 = vld [vmem:[#allocation4 + $0x140] sm:$0xff]
    %v193 = vld [vmem:[#allocation4 + $0x148] sm:$0xff]
    %v194 = vld [vmem:[#allocation4 + $0x150] sm:$0xff]
    %v195 = vld [vmem:[#allocation4 + $0x158] sm:$0xff]
    %v196 = vld [vmem:[#allocation4 + $0x160] sm:$0xff]
    %v197 = vld [vmem:[#allocation4 + $0x168] sm:$0xff]
    %v198 = vld [vmem:[#allocation4 + $0x170] sm:$0xff]
    %v199 = vld [vmem:[#allocation4 + $0x178] sm:$0xff]
    %v200 = vld [vmem:[#allocation4 + $0x180] sm:$0xff]
    %v201 = vld [vmem:[#allocation4 + $0x188] sm:$0xff]
    %v202 = vld [vmem:[#allocation4 + $0x190] sm:$0xff]
    %v203 = vld [vmem:[#allocation4 + $0x198] sm:$0xff]
    %v204 = vld [vmem:[#allocation4 + $0x1a0] sm:$0xff]
    %v205 = vld [vmem:[#allocation4 + $0x1a8] sm:$0xff]
    %v206 = vld [vmem:[#allocation4 + $0x1b0] sm:$0xff]
    %v207 = vld [vmem:[#allocation4 + $0x1b8] sm:$0xff]
    %v208 = vld [vmem:[#allocation4 + $0x1c0] sm:$0xff]
    %v209 = vld [vmem:[#allocation4 + $0x1c8] sm:$0xff]
    %v210 = vld [vmem:[#allocation4 + $0x1d0] sm:$0xff]
    %v211 = vld [vmem:[#allocation4 + $0x1d8] sm:$0xff]
    %v212 = vld [vmem:[#allocation4 + $0x1e0] sm:$0xff]
    %v213 = vld [vmem:[#allocation4 + $0x1e8] sm:$0xff]
    %v214 = vld [vmem:[#allocation4 + $0x1f0] sm:$0xff]
    %v215 = vld [vmem:[#allocation4 + $0x1f8] sm:$0xff]
    %v216 = vld [vmem:[#allocation4 + $0x200] sm:$0xff]
    %v217 = vld [vmem:[#allocation4 + $0x208] sm:$0xff]
    %v218 = vld [vmem:[#allocation4 + $0x210] sm:$0xff]
    %v219 = vld [vmem:[#allocation4 + $0x218] sm:$0xff]
    %v220 = vld [vmem:[#allocation4 + $0x220] sm:$0xff]
    %v221 = vld [vmem:[#allocation4 + $0x228] sm:$0xff]
    %v222 = vld [vmem:[#allocation4 + $0x230] sm:$0xff]
    %v223 = vld [vmem:[#allocation4 + $0x238] sm:$0xff]
    %v224 = vld [vmem:[#allocation4 + $0x240] sm:$0xff]
    %v225 = vld [vmem:[#allocation4 + $0x248] sm:$0xff]
    %v226 = vld [vmem:[#allocation4 + $0x250] sm:$0xff]
    %v227 = vld [vmem:[#allocation4 + $0x258] sm:$0xff]
    %v228 = vld [vmem:[#allocation4 + $0x260] sm:$0xff]
    %v229 = vld [vmem:[#allocation4 + $0x268] sm:$0xff]
    %v230 = vld [vmem:[#allocation4 + $0x270] sm:$0xff]
    %v231 = vld [vmem:[#allocation4 + $0x278] sm:$0xff]
    %v232 = vld [vmem:[#allocation4 + $0x280] sm:$0xff]
    %v233 = vld [vmem:[#allocation4 + $0x288] sm:$0xff]
    %v234 = vld [vmem:[#allocation4 + $0x290] sm:$0xff]
    %v235 = vld [vmem:[#allocation4 + $0x298] sm:$0xff]
    %v236 = vld [vmem:[#allocation4 + $0x2a0] sm:$0xff]
    %v237 = vld [vmem:[#allocation4 + $0x2a8] sm:$0xff]
    %v238 = vld [vmem:[#allocation4 + $0x2b0] sm:$0xff]
    %v239 = vld [vmem:[#allocation4 + $0x2b8] sm:$0xff]
    %v240 = vld [vmem:[#allocation4 + $0x2c0] sm:$0xff]
    %v241 = vld [vmem:[#allocation4 + $0x2c8] sm:$0xff]
    %v242 = vld [vmem:[#allocation4 + $0x2d0] sm:$0xff]
    %v243 = vld [vmem:[#allocation4 + $0x2d8] sm:$0xff]
    %v244 = vld [vmem:[#allocation4 + $0x2e0] sm:$0xff]
    %v245 = vld [vmem:[#allocation4 + $0x2e8] sm:$0xff]
    %v246 = vld [vmem:[#allocation4 + $0x2f0] sm:$0xff]
    %v247 = vld [vmem:[#allocation4 + $0x2f8] sm:$0xff]
    %v248 = vld [vmem:[#allocation4 + $0x300] sm:$0xff]
    %v249 = vld [vmem:[#allocation4 + $0x308] sm:$0xff]
    %v250 = vld [vmem:[#allocation4 + $0x310] sm:$0xff]
    %v251 = vld [vmem:[#allocation4 + $0x318] sm:$0xff]
    %v252 = vld [vmem:[#allocation4 + $0x320] sm:$0xff]
    %v253 = vld [vmem:[#allocation4 + $0x328] sm:$0xff]
    %v254 = vld [vmem:[#allocation4 + $0x330] sm:$0xff]
    %v255 = vld [vmem:[#allocation4 + $0x338] sm:$0xff]
    %v256 = vld [vmem:[#allocation4 + $0x340] sm:$0xff]
    %v257 = vld [vmem:[#allocation4 + $0x348] sm:$0xff]
    %v258 = vld [vmem:[#allocation4 + $0x350] sm:$0xff]
    %v259 = vld [vmem:[#allocation4 + $0x358] sm:$0xff]
    %v260 = vld [vmem:[#allocation4 + $0x360] sm:$0xff]
    %v261 = vld [vmem:[#allocation4 + $0x368] sm:$0xff]
    %v262 = vld [vmem:[#allocation4 + $0x370] sm:$0xff]
    %v263 = vld [vmem:[#allocation4 + $0x378] sm:$0xff]
    %v264 = vld [vmem:[#allocation4 + $0x380] sm:$0xff]
    %v265 = vld [vmem:[#allocation4 + $0x388] sm:$0xff]
    %v266 = vld [vmem:[#allocation4 + $0x390] sm:$0xff]
    %v267 = vld [vmem:[#allocation4 + $0x398] sm:$0xff]
    %v268 = vld [vmem:[#allocation4 + $0x3a0] sm:$0xff]
    %v269 = vld [vmem:[#allocation4 + $0x3a8] sm:$0xff]
    %v270 = vld [vmem:[#allocation4 + $0x3b0] sm:$0xff]
    %v271 = vld [vmem:[#allocation4 + $0x3b8] sm:$0xff]
    %v272 = vld [vmem:[#allocation4 + $0x3c0] sm:$0xff]
    %v273 = vld [vmem:[#allocation4 + $0x3c8] sm:$0xff]
    %v274 = vld [vmem:[#allocation4 + $0x3d0] sm:$0xff]
    %v275 = vld [vmem:[#allocation4 + $0x3d8] sm:$0xff]
    %v276 = vld [vmem:[#allocation4 + $0x3e0] sm:$0xff]
    %v277 = vld [vmem:[#allocation4 + $0x3e8] sm:$0xff]
    %v278 = vld [vmem:[#allocation4 + $0x3f0] sm:$0xff]
    %v279 = vld [vmem:[#allocation4 + $0x3f8] sm:$0xff]
    %v280 = vld [vmem:[#allocation4 + $0x400] sm:$0xff]
    %v281 = vld [vmem:[#allocation4 + $0x408] sm:$0xff]
    %v282 = vld [vmem:[#allocation4 + $0x410] sm:$0xff]
    %v283 = vld [vmem:[#allocation4 + $0x418] sm:$0xff]
    %v284 = vld [vmem:[#allocation4 + $0x420] sm:$0xff]
    %v285 = vld [vmem:[#allocation4 + $0x428] sm:$0xff]
    %v286 = vld [vmem:[#allocation4 + $0x430] sm:$0xff]
    %v287 = vld [vmem:[#allocation4 + $0x438] sm:$0xff]
    %v288 = vld [vmem:[#allocation4 + $0x440] sm:$0xff]
    %v289 = vld [vmem:[#allocation4 + $0x448] sm:$0xff]
    %v290 = vld [vmem:[#allocation4 + $0x450] sm:$0xff]
    %v291 = vld [vmem:[#allocation4 + $0x458] sm:$0xff]
    %v292 = vld [vmem:[#allocation4 + $0x460] sm:$0xff]
    %v293 = vld [vmem:[#allocation4 + $0x468] sm:$0xff]
    %v294 = vld [vmem:[#allocation4 + $0x470] sm:$0xff]
    %v295 = vld [vmem:[#allocation4 + $0x478] sm:$0xff]
    %v296 = vld [vmem:[#allocation4 + $0x480] sm:$0xff]
    %v297 = vld [vmem:[#allocation4 + $0x488] sm:$0xff]
    %v298 = vld [vmem:[#allocation4 + $0x490] sm:$0xff]
    %v299 = vld [vmem:[#allocation4 + $0x498] sm:$0xff]
    %v300 = vld [vmem:[#allocation4 + $0x4a0] sm:$0xff]
    %v301 = vld [vmem:[#allocation4 + $0x4a8] sm:$0xff]
    %v302 = vld [vmem:[#allocation4 + $0x4b0] sm:$0xff]
    %v303 = vld [vmem:[#allocation4 + $0x4b8] sm:$0xff]
    %v304 = vld [vmem:[#allocation4 + $0x4c0] sm:$0xff]
    %v305 = vld [vmem:[#allocation4 + $0x4c8] sm:$0xff]
    %v306 = vld [vmem:[#allocation4 + $0x4d0] sm:$0xff]
    %v307 = vld [vmem:[#allocation4 + $0x4d8] sm:$0xff]
    %v308 = vld [vmem:[#allocation4 + $0x4e0] sm:$0xff]
    %v309 = vld [vmem:[#allocation4 + $0x4e8] sm:$0xff]
    %v310 = vld [vmem:[#allocation4 + $0x4f0] sm:$0xff]
    %v311 = vld [vmem:[#allocation4 + $0x4f8] sm:$0xff]
    %v312 = vld [vmem:[#allocation4 + $0x500] sm:$0xff]
    %v313 = vld [vmem:[#allocation4 + $0x508] sm:$0xff]
    %v314 = vld [vmem:[#allocation4 + $0x510] sm:$0xff]
    %v315 = vld [vmem:[#allocation4 + $0x518] sm:$0xff]
    %v316 = vld [vmem:[#allocation4 + $0x520] sm:$0xff]
    %v317 = vld [vmem:[#allocation4 + $0x528] sm:$0xff]
    %v318 = vld [vmem:[#allocation4 + $0x530] sm:$0xff]
    %v319 = vld [vmem:[#allocation4 + $0x538] sm:$0xff]
    %v320 = vld [vmem:[#allocation4 + $0x540] sm:$0xff]
    %v321 = vld [vmem:[#allocation4 + $0x548] sm:$0xff]
    %v322 = vld [vmem:[#allocation4 + $0x550] sm:$0xff]
    %v323 = vld [vmem:[#allocation4 + $0x558] sm:$0xff]
    %v324 = vld [vmem:[#allocation4 + $0x560] sm:$0xff]
    %v325 = vld [vmem:[#allocation4 + $0x568] sm:$0xff]
    %v326 = vld [vmem:[#allocation4 + $0x570] sm:$0xff]
    %v327 = vld [vmem:[#allocation4 + $0x578] sm:$0xff]
    %v328 = vld [vmem:[#allocation4 + $0x580] sm:$0xff]
    %v329 = vld [vmem:[#allocation4 + $0x588] sm:$0xff]
    %v330 = vld [vmem:[#allocation4 + $0x590] sm:$0xff]
    %v331 = vld [vmem:[#allocation4 + $0x598] sm:$0xff]
    %v332 = vld [vmem:[%s4] sm:$0xff]
    %v333 = vld [vmem:[%s4 + $0x8] sm:$0x3]
    %v336 = vperm.slane %v332, 0
    %v337 = vperm.slane %v332, 1
    %v338 = vperm.slane %v332, 2
    %v339 = vperm.slane %v332, 3
    %v340 = vperm.slane %v332, 4
    %v341 = vperm.slane %v332, 5
    %v342 = vperm.slane %v332, 6
    %v343 = vperm.slane %v332, 7
    %v344 = vperm.slane %v333, 0
    %v345 = vperm.slane %v333, 1
    %v536 = vunpack.c.l.b16 %v152
    %v537 = vunpack.c.h.b16 %v152
    %v538 = vunpack.c.l.b16 %v153
    %v539 = vunpack.c.h.b16 %v153
    %v540 = vunpack.c.l.b16 %v154
    %v541 = vunpack.c.h.b16 %v154
    %v542 = vunpack.c.l.b16 %v155
    %v543 = vunpack.c.h.b16 %v155
    %v544 = vunpack.c.l.b16 %v156
    %v545 = vunpack.c.h.b16 %v156
    %v546 = vunpack.c.l.b16 %v157
    %v547 = vunpack.c.h.b16 %v157
    %v548 = vunpack.c.l.b16 %v158
    %v549 = vunpack.c.h.b16 %v158
    %v550 = vunpack.c.l.b16 %v159
    %v551 = vunpack.c.h.b16 %v159
    %v552 = vunpack.c.l.b16 %v160
    %v553 = vunpack.c.h.b16 %v160
    %v554 = vunpack.c.l.b16 %v161
    %v555 = vunpack.c.h.b16 %v161
    %v556 = vunpack.c.l.b16 %v162
    %v557 = vunpack.c.h.b16 %v162
    %v558 = vunpack.c.l.b16 %v163
    %v559 = vunpack.c.h.b16 %v163
    %v560 = vunpack.c.l.b16 %v164
    %v561 = vunpack.c.h.b16 %v164
    %v562 = vunpack.c.l.b16 %v165
    %v563 = vunpack.c.h.b16 %v165
    %v564 = vunpack.c.l.b16 %v166
    %v565 = vunpack.c.h.b16 %v166
    %v566 = vunpack.c.l.b16 %v167
    %v567 = vunpack.c.h.b16 %v167
    %v568 = vunpack.c.l.b16 %v168
    %v569 = vunpack.c.h.b16 %v168
    %v570 = vunpack.c.l.b16 %v169
    %v571 = vunpack.c.h.b16 %v169
    %v572 = vunpack.c.l.b16 %v170
    %v573 = vunpack.c.h.b16 %v170
    %v574 = vunpack.c.l.b16 %v171
    %v575 = vunpack.c.h.b16 %v171
    %v576 = vunpack.c.l.b16 %v172
    %v577 = vunpack.c.h.b16 %v172
    %v578 = vunpack.c.l.b16 %v173
    %v579 = vunpack.c.h.b16 %v173
    %v580 = vunpack.c.l.b16 %v174
    %v581 = vunpack.c.h.b16 %v174
    %v582 = vunpack.c.l.b16 %v175
    %v583 = vunpack.c.h.b16 %v175
    %v584 = vunpack.c.l.b16 %v176
    %v585 = vunpack.c.h.b16 %v176
    %v586 = vunpack.c.l.b16 %v177
    %v587 = vunpack.c.h.b16 %v177
    %v588 = vunpack.c.l.b16 %v178
    %v589 = vunpack.c.h.b16 %v178
    %v590 = vunpack.c.l.b16 %v179
    %v591 = vunpack.c.h.b16 %v179
    %v592 = vunpack.c.l.b16 %v180
    %v593 = vunpack.c.h.b16 %v180
    %v594 = vunpack.c.l.b16 %v181
    %v595 = vunpack.c.h.b16 %v181
    %v596 = vunpack.c.l.b16 %v182
    %v597 = vunpack.c.h.b16 %v182
    %v598 = vunpack.c.l.b16 %v183
    %v599 = vunpack.c.h.b16 %v183
    %v600 = vunpack.c.l.b16 %v184
    %v601 = vunpack.c.h.b16 %v184
    %v602 = vunpack.c.l.b16 %v185
    %v603 = vunpack.c.h.b16 %v185
    %v604 = vunpack.c.l.b16 %v186
    %v605 = vunpack.c.h.b16 %v186
    %v606 = vunpack.c.l.b16 %v187
    %v607 = vunpack.c.h.b16 %v187
    %v608 = vunpack.c.l.b16 %v188
    %v609 = vunpack.c.h.b16 %v188
    %v610 = vunpack.c.l.b16 %v189
    %v611 = vunpack.c.h.b16 %v189
    %v612 = vunpack.c.l.b16 %v190
    %v613 = vunpack.c.h.b16 %v190
    %v614 = vunpack.c.l.b16 %v191
    %v615 = vunpack.c.h.b16 %v191
    %v616 = vunpack.c.l.b16 %v192
    %v617 = vunpack.c.h.b16 %v192
    %v618 = vunpack.c.l.b16 %v193
    %v619 = vunpack.c.h.b16 %v193
    %v620 = vunpack.c.l.b16 %v194
    %v621 = vunpack.c.h.b16 %v194
    %v622 = vunpack.c.l.b16 %v195
    %v623 = vunpack.c.h.b16 %v195
    %v624 = vunpack.c.l.b16 %v196
    %v625 = vunpack.c.h.b16 %v196
    %v626 = vunpack.c.l.b16 %v197
    %v627 = vunpack.c.h.b16 %v197
    %v628 = vunpack.c.l.b16 %v198
    %v629 = vunpack.c.h.b16 %v198
    %v630 = vunpack.c.l.b16 %v199
    %v631 = vunpack.c.h.b16 %v199
    %v632 = vunpack.c.l.b16 %v200
    %v633 = vunpack.c.h.b16 %v200
    %v634 = vunpack.c.l.b16 %v201
    %v635 = vunpack.c.h.b16 %v201
    %v636 = vunpack.c.l.b16 %v202
    %v637 = vunpack.c.h.b16 %v202
    %v638 = vunpack.c.l.b16 %v203
    %v639 = vunpack.c.h.b16 %v203
    %v640 = vunpack.c.l.b16 %v204
    %v641 = vunpack.c.h.b16 %v204
    %v642 = vunpack.c.l.b16 %v205
    %v643 = vunpack.c.h.b16 %v205
    %v644 = vunpack.c.l.b16 %v206
    %v645 = vunpack.c.h.b16 %v206
    %v646 = vunpack.c.l.b16 %v207
    %v647 = vunpack.c.h.b16 %v207
    %v648 = vunpack.c.l.b16 %v208
    %v649 = vunpack.c.h.b16 %v208
    %v650 = vunpack.c.l.b16 %v209
    %v651 = vunpack.c.h.b16 %v209
    %v652 = vunpack.c.l.b16 %v210
    %v653 = vunpack.c.h.b16 %v210
    %v654 = vunpack.c.l.b16 %v211
    %v655 = vunpack.c.h.b16 %v211
    %v656 = vunpack.c.l.b16 %v212
    %v657 = vunpack.c.h.b16 %v212
    %v658 = vunpack.c.l.b16 %v213
    %v659 = vunpack.c.h.b16 %v213
    %v660 = vunpack.c.l.b16 %v214
    %v661 = vunpack.c.h.b16 %v214
    %v662 = vunpack.c.l.b16 %v215
    %v663 = vunpack.c.h.b16 %v215
    %v664 = vunpack.c.l.b16 %v216
    %v665 = vunpack.c.h.b16 %v216
    %v666 = vunpack.c.l.b16 %v217
    %v667 = vunpack.c.h.b16 %v217
    %v668 = vunpack.c.l.b16 %v218
    %v669 = vunpack.c.h.b16 %v218
    %v670 = vunpack.c.l.b16 %v219
    %v671 = vunpack.c.h.b16 %v219
    %v672 = vunpack.c.l.b16 %v220
    %v673 = vunpack.c.h.b16 %v220
    %v674 = vunpack.c.l.b16 %v221
    %v675 = vunpack.c.h.b16 %v221
    %v676 = vunpack.c.l.b16 %v222
    %v677 = vunpack.c.h.b16 %v222
    %v678 = vunpack.c.l.b16 %v223
    %v679 = vunpack.c.h.b16 %v223
    %v680 = vunpack.c.l.b16 %v224
    %v681 = vunpack.c.h.b16 %v224
    %v682 = vunpack.c.l.b16 %v225
    %v683 = vunpack.c.h.b16 %v225
    %v684 = vunpack.c.l.b16 %v226
    %v685 = vunpack.c.h.b16 %v226
    %v686 = vunpack.c.l.b16 %v227
    %v687 = vunpack.c.h.b16 %v227
    %v688 = vunpack.c.l.b16 %v228
    %v689 = vunpack.c.h.b16 %v228
    %v690 = vunpack.c.l.b16 %v229
    %v691 = vunpack.c.h.b16 %v229
    %v692 = vunpack.c.l.b16 %v230
    %v693 = vunpack.c.h.b16 %v230
    %v694 = vunpack.c.l.b16 %v231
    %v695 = vunpack.c.h.b16 %v231
    %v696 = vunpack.c.l.b16 %v232
    %v697 = vunpack.c.h.b16 %v232
    %v698 = vunpack.c.l.b16 %v233
    %v699 = vunpack.c.h.b16 %v233
    %v700 = vunpack.c.l.b16 %v234
    %v701 = vunpack.c.h.b16 %v234
    %v702 = vunpack.c.l.b16 %v235
    %v703 = vunpack.c.h.b16 %v235
    %v704 = vunpack.c.l.b16 %v236
    %v705 = vunpack.c.h.b16 %v236
    %v706 = vunpack.c.l.b16 %v237
    %v707 = vunpack.c.h.b16 %v237
    %v708 = vunpack.c.l.b16 %v238
    %v709 = vunpack.c.h.b16 %v238
    %v710 = vunpack.c.l.b16 %v239
    %v711 = vunpack.c.h.b16 %v239
    %v712 = vunpack.c.l.b16 %v240
    %v713 = vunpack.c.h.b16 %v240
    %v714 = vunpack.c.l.b16 %v241
    %v715 = vunpack.c.h.b16 %v241
    %v716 = vunpack.c.l.b16 %v242
    %v717 = vunpack.c.h.b16 %v242
    %v718 = vunpack.c.l.b16 %v243
    %v719 = vunpack.c.h.b16 %v243
    %v720 = vunpack.c.l.b16 %v244
    %v721 = vunpack.c.h.b16 %v244
    %v722 = vunpack.c.l.b16 %v245
    %v723 = vunpack.c.h.b16 %v245
    %v724 = vunpack.c.l.b16 %v246
    %v725 = vunpack.c.h.b16 %v246
    %v726 = vunpack.c.l.b16 %v247
    %v727 = vunpack.c.h.b16 %v247
    %v728 = vunpack.c.l.b16 %v248
    %v729 = vunpack.c.h.b16 %v248
    %v730 = vunpack.c.l.b16 %v249
    %v731 = vunpack.c.h.b16 %v249
    %v732 = vunpack.c.l.b16 %v250
    %v733 = vunpack.c.h.b16 %v250
    %v734 = vunpack.c.l.b16 %v251
    %v735 = vunpack.c.h.b16 %v251
    %v736 = vunpack.c.l.b16 %v252
    %v737 = vunpack.c.h.b16 %v252
    %v738 = vunpack.c.l.b16 %v253
    %v739 = vunpack.c.h.b16 %v253
    %v740 = vunpack.c.l.b16 %v254
    %v741 = vunpack.c.h.b16 %v254
    %v742 = vunpack.c.l.b16 %v255
    %v743 = vunpack.c.h.b16 %v255
    %v744 = vunpack.c.l.b16 %v256
    %v745 = vunpack.c.h.b16 %v256
    %v746 = vunpack.c.l.b16 %v257
    %v747 = vunpack.c.h.b16 %v257
    %v748 = vunpack.c.l.b16 %v258
    %v749 = vunpack.c.h.b16 %v258
    %v750 = vunpack.c.l.b16 %v259
    %v751 = vunpack.c.h.b16 %v259
    %v752 = vunpack.c.l.b16 %v260
    %v753 = vunpack.c.h.b16 %v260
    %v754 = vunpack.c.l.b16 %v261
    %v755 = vunpack.c.h.b16 %v261
    %v756 = vunpack.c.l.b16 %v262
    %v757 = vunpack.c.h.b16 %v262
    %v758 = vunpack.c.l.b16 %v263
    %v759 = vunpack.c.h.b16 %v263
    %v760 = vunpack.c.l.b16 %v264
    %v761 = vunpack.c.h.b16 %v264
    %v762 = vunpack.c.l.b16 %v265
    %v763 = vunpack.c.h.b16 %v265
    %v764 = vunpack.c.l.b16 %v266
    %v765 = vunpack.c.h.b16 %v266
    %v766 = vunpack.c.l.b16 %v267
    %v767 = vunpack.c.h.b16 %v267
    %v768 = vunpack.c.l.b16 %v268
    %v769 = vunpack.c.h.b16 %v268
    %v770 = vunpack.c.l.b16 %v269
    %v771 = vunpack.c.h.b16 %v269
    %v772 = vunpack.c.l.b16 %v270
    %v773 = vunpack.c.h.b16 %v270
    %v774 = vunpack.c.l.b16 %v271
    %v775 = vunpack.c.h.b16 %v271
    %v776 = vunpack.c.l.b16 %v272
    %v777 = vunpack.c.h.b16 %v272
    %v778 = vunpack.c.l.b16 %v273
    %v779 = vunpack.c.h.b16 %v273
    %v780 = vunpack.c.l.b16 %v274
    %v781 = vunpack.c.h.b16 %v274
    %v782 = vunpack.c.l.b16 %v275
    %v783 = vunpack.c.h.b16 %v275
    %v784 = vunpack.c.l.b16 %v276
    %v785 = vunpack.c.h.b16 %v276
    %v786 = vunpack.c.l.b16 %v277
    %v787 = vunpack.c.h.b16 %v277
    %v788 = vunpack.c.l.b16 %v278
    %v789 = vunpack.c.h.b16 %v278
    %v790 = vunpack.c.l.b16 %v279
    %v791 = vunpack.c.h.b16 %v279
    %v792 = vunpack.c.l.b16 %v280
    %v793 = vunpack.c.h.b16 %v280
    %v794 = vunpack.c.l.b16 %v281
    %v795 = vunpack.c.h.b16 %v281
    %v796 = vunpack.c.l.b16 %v282
    %v797 = vunpack.c.h.b16 %v282
    %v798 = vunpack.c.l.b16 %v283
    %v799 = vunpack.c.h.b16 %v283
    %v800 = vunpack.c.l.b16 %v284
    %v801 = vunpack.c.h.b16 %v284
    %v802 = vunpack.c.l.b16 %v285
    %v803 = vunpack.c.h.b16 %v285
    %v804 = vunpack.c.l.b16 %v286
    %v805 = vunpack.c.h.b16 %v286
    %v806 = vunpack.c.l.b16 %v287
    %v807 = vunpack.c.h.b16 %v287
    %v808 = vunpack.c.l.b16 %v288
    %v809 = vunpack.c.h.b16 %v288
    %v810 = vunpack.c.l.b16 %v289
    %v811 = vunpack.c.h.b16 %v289
    %v812 = vunpack.c.l.b16 %v290
    %v813 = vunpack.c.h.b16 %v290
    %v814 = vunpack.c.l.b16 %v291
    %v815 = vunpack.c.h.b16 %v291
    %v816 = vunpack.c.l.b16 %v292
    %v817 = vunpack.c.h.b16 %v292
    %v818 = vunpack.c.l.b16 %v293
    %v819 = vunpack.c.h.b16 %v293
    %v820 = vunpack.c.l.b16 %v294
    %v821 = vunpack.c.h.b16 %v294
    %v822 = vunpack.c.l.b16 %v295
    %v823 = vunpack.c.h.b16 %v295
    %v824 = vunpack.c.l.b16 %v296
    %v825 = vunpack.c.h.b16 %v296
    %v826 = vunpack.c.l.b16 %v297
    %v827 = vunpack.c.h.b16 %v297
    %v828 = vunpack.c.l.b16 %v298
    %v829 = vunpack.c.h.b16 %v298
    %v830 = vunpack.c.l.b16 %v299
    %v831 = vunpack.c.h.b16 %v299
    %v832 = vunpack.c.l.b16 %v300
    %v833 = vunpack.c.h.b16 %v300
    %v834 = vunpack.c.l.b16 %v301
    %v835 = vunpack.c.h.b16 %v301
    %v836 = vunpack.c.l.b16 %v302
    %v837 = vunpack.c.h.b16 %v302
    %v838 = vunpack.c.l.b16 %v303
    %v839 = vunpack.c.h.b16 %v303
    %v840 = vunpack.c.l.b16 %v304
    %v841 = vunpack.c.h.b16 %v304
    %v842 = vunpack.c.l.b16 %v305
    %v843 = vunpack.c.h.b16 %v305
    %v844 = vunpack.c.l.b16 %v306
    %v845 = vunpack.c.h.b16 %v306
    %v846 = vunpack.c.l.b16 %v307
    %v847 = vunpack.c.h.b16 %v307
    %v848 = vunpack.c.l.b16 %v308
    %v849 = vunpack.c.h.b16 %v308
    %v850 = vunpack.c.l.b16 %v309
    %v851 = vunpack.c.h.b16 %v309
    %v852 = vunpack.c.l.b16 %v310
    %v853 = vunpack.c.h.b16 %v310
    %v854 = vunpack.c.l.b16 %v311
    %v855 = vunpack.c.h.b16 %v311
    %v856 = vunpack.c.l.b16 %v312
    %v857 = vunpack.c.h.b16 %v312
    %v858 = vunpack.c.l.b16 %v313
    %v859 = vunpack.c.h.b16 %v313
    %v860 = vunpack.c.l.b16 %v314
    %v861 = vunpack.c.h.b16 %v314
    %v862 = vunpack.c.l.b16 %v315
    %v863 = vunpack.c.h.b16 %v315
    %v864 = vunpack.c.l.b16 %v316
    %v865 = vunpack.c.h.b16 %v316
    %v866 = vunpack.c.l.b16 %v317
    %v867 = vunpack.c.h.b16 %v317
    %v868 = vunpack.c.l.b16 %v318
    %v869 = vunpack.c.h.b16 %v318
    %v870 = vunpack.c.l.b16 %v319
    %v871 = vunpack.c.h.b16 %v319
    %v872 = vunpack.c.l.b16 %v320
    %v873 = vunpack.c.h.b16 %v320
    %v874 = vunpack.c.l.b16 %v321
    %v875 = vunpack.c.h.b16 %v321
    %v876 = vunpack.c.l.b16 %v322
    %v877 = vunpack.c.h.b16 %v322
    %v878 = vunpack.c.l.b16 %v323
    %v879 = vunpack.c.h.b16 %v323
    %v880 = vunpack.c.l.b16 %v324
    %v881 = vunpack.c.h.b16 %v324
    %v882 = vunpack.c.l.b16 %v325
    %v883 = vunpack.c.h.b16 %v325
    %v884 = vunpack.c.l.b16 %v326
    %v885 = vunpack.c.h.b16 %v326
    %v886 = vunpack.c.l.b16 %v327
    %v887 = vunpack.c.h.b16 %v327
    %v888 = vunpack.c.l.b16 %v328
    %v889 = vunpack.c.h.b16 %v328
    %v890 = vunpack.c.l.b16 %v329
    %v891 = vunpack.c.h.b16 %v329
    %v892 = vunpack.c.l.b16 %v330
    %v893 = vunpack.c.h.b16 %v330
    %v894 = vunpack.c.l.b16 %v331
    %v895 = vunpack.c.h.b16 %v331
    %v896 = vpack.c.b16 %v546, %v536
    %v897 = vpack.c.b16 %v547, %v537
    %v898 = vpack.c.b16 %v548, %v538
    %v899 = vpack.c.b16 %v549, %v539
    %v900 = vpack.c.b16 %v550, %v540
    %v901 = vpack.c.b16 %v551, %v541
    %v902 = vpack.c.b16 %v552, %v542
    %v903 = vpack.c.b16 %v553, %v543
    %v904 = vpack.c.b16 %v554, %v544
    %v905 = vpack.c.b16 %v555, %v545
    %v906 = vpack.c.b16 %v566, %v556
    %v907 = vpack.c.b16 %v567, %v557
    %v908 = vpack.c.b16 %v568, %v558
    %v909 = vpack.c.b16 %v569, %v559
    %v910 = vpack.c.b16 %v570, %v560
    %v911 = vpack.c.b16 %v571, %v561
    %v912 = vpack.c.b16 %v572, %v562
    %v913 = vpack.c.b16 %v573, %v563
    %v914 = vpack.c.b16 %v574, %v564
    %v915 = vpack.c.b16 %v575, %v565
    %v916 = vpack.c.b16 %v586, %v576
    %v917 = vpack.c.b16 %v587, %v577
    %v918 = vpack.c.b16 %v588, %v578
    %v919 = vpack.c.b16 %v589, %v579
    %v920 = vpack.c.b16 %v590, %v580
    %v921 = vpack.c.b16 %v591, %v581
    %v922 = vpack.c.b16 %v592, %v582
    %v923 = vpack.c.b16 %v593, %v583
    %v924 = vpack.c.b16 %v594, %v584
    %v925 = vpack.c.b16 %v595, %v585
    %v926 = vpack.c.b16 %v606, %v596
    %v927 = vpack.c.b16 %v607, %v597
    %v928 = vpack.c.b16 %v608, %v598
    %v929 = vpack.c.b16 %v609, %v599
    %v930 = vpack.c.b16 %v610, %v600
    %v931 = vpack.c.b16 %v611, %v601
    %v932 = vpack.c.b16 %v612, %v602
    %v933 = vpack.c.b16 %v613, %v603
    %v934 = vpack.c.b16 %v614, %v604
    %v935 = vpack.c.b16 %v615, %v605
    %v936 = vpack.c.b16 %v626, %v616
    %v937 = vpack.c.b16 %v627, %v617
    %v938 = vpack.c.b16 %v628, %v618
    %v939 = vpack.c.b16 %v629, %v619
    %v940 = vpack.c.b16 %v630, %v620
    %v941 = vpack.c.b16 %v631, %v621
    %v942 = vpack.c.b16 %v632, %v622
    %v943 = vpack.c.b16 %v633, %v623
    %v944 = vpack.c.b16 %v634, %v624
    %v945 = vpack.c.b16 %v635, %v625
    %v946 = vpack.c.b16 %v646, %v636
    %v947 = vpack.c.b16 %v647, %v637
    %v948 = vpack.c.b16 %v648, %v638
    %v949 = vpack.c.b16 %v649, %v639
    %v950 = vpack.c.b16 %v650, %v640
    %v951 = vpack.c.b16 %v651, %v641
    %v952 = vpack.c.b16 %v652, %v642
    %v953 = vpack.c.b16 %v653, %v643
    %v954 = vpack.c.b16 %v654, %v644
    %v955 = vpack.c.b16 %v655, %v645
    %v956 = vpack.c.b16 %v666, %v656
    %v957 = vpack.c.b16 %v667, %v657
    %v958 = vpack.c.b16 %v668, %v658
    %v959 = vpack.c.b16 %v669, %v659
    %v960 = vpack.c.b16 %v670, %v660
    %v961 = vpack.c.b16 %v671, %v661
    %v962 = vpack.c.b16 %v672, %v662
    %v963 = vpack.c.b16 %v673, %v663
    %v964 = vpack.c.b16 %v674, %v664
    %v965 = vpack.c.b16 %v675, %v665
    %v966 = vpack.c.b16 %v686, %v676
    %v967 = vpack.c.b16 %v687, %v677
    %v968 = vpack.c.b16 %v688, %v678
    %v969 = vpack.c.b16 %v689, %v679
    %v970 = vpack.c.b16 %v690, %v680
    %v971 = vpack.c.b16 %v691, %v681
    %v972 = vpack.c.b16 %v692, %v682
    %v973 = vpack.c.b16 %v693, %v683
    %v974 = vpack.c.b16 %v694, %v684
    %v975 = vpack.c.b16 %v695, %v685
    %v976 = vpack.c.b16 %v706, %v696
    %v977 = vpack.c.b16 %v707, %v697
    %v978 = vpack.c.b16 %v708, %v698
    %v979 = vpack.c.b16 %v709, %v699
    %v980 = vpack.c.b16 %v710, %v700
    %v981 = vpack.c.b16 %v711, %v701
    %v982 = vpack.c.b16 %v712, %v702
    %v983 = vpack.c.b16 %v713, %v703
    %v984 = vpack.c.b16 %v714, %v704
    %v985 = vpack.c.b16 %v715, %v705
    %v986 = vpack.c.b16 %v726, %v716
    %v987 = vpack.c.b16 %v727, %v717
    %v988 = vpack.c.b16 %v728, %v718
    %v989 = vpack.c.b16 %v729, %v719
    %v990 = vpack.c.b16 %v730, %v720
    %v991 = vpack.c.b16 %v731, %v721
    %v992 = vpack.c.b16 %v732, %v722
    %v993 = vpack.c.b16 %v733, %v723
    %v994 = vpack.c.b16 %v734, %v724
    %v995 = vpack.c.b16 %v735, %v725
    %v996 = vpack.c.b16 %v746, %v736
    %v997 = vpack.c.b16 %v747, %v737
    %v998 = vpack.c.b16 %v748, %v738
    %v999 = vpack.c.b16 %v749, %v739
    %v1000 = vpack.c.b16 %v750, %v740
    %v1001 = vpack.c.b16 %v751, %v741
    %v1002 = vpack.c.b16 %v752, %v742
    %v1003 = vpack.c.b16 %v753, %v743
    %v1004 = vpack.c.b16 %v754, %v744
    %v1005 = vpack.c.b16 %v755, %v745
    %v1006 = vpack.c.b16 %v766, %v756
    %v1007 = vpack.c.b16 %v767, %v757
    %v1008 = vpack.c.b16 %v768, %v758
    %v1009 = vpack.c.b16 %v769, %v759
    %v1010 = vpack.c.b16 %v770, %v760
    %v1011 = vpack.c.b16 %v771, %v761
    %v1012 = vpack.c.b16 %v772, %v762
    %v1013 = vpack.c.b16 %v773, %v763
    %v1014 = vpack.c.b16 %v774, %v764
    %v1015 = vpack.c.b16 %v775, %v765
    %v1016 = vpack.c.b16 %v786, %v776
    %v1017 = vpack.c.b16 %v787, %v777
    %v1018 = vpack.c.b16 %v788, %v778
    %v1019 = vpack.c.b16 %v789, %v779
    %v1020 = vpack.c.b16 %v790, %v780
    %v1021 = vpack.c.b16 %v791, %v781
    %v1022 = vpack.c.b16 %v792, %v782
    %v1023 = vpack.c.b16 %v793, %v783
    %v1024 = vpack.c.b16 %v794, %v784
    %v1025 = vpack.c.b16 %v795, %v785
    %v1026 = vpack.c.b16 %v806, %v796
    %v1027 = vpack.c.b16 %v807, %v797
    %v1028 = vpack.c.b16 %v808, %v798
    %v1029 = vpack.c.b16 %v809, %v799
    %v1030 = vpack.c.b16 %v810, %v800
    %v1031 = vpack.c.b16 %v811, %v801
    %v1032 = vpack.c.b16 %v812, %v802
    %v1033 = vpack.c.b16 %v813, %v803
    %v1034 = vpack.c.b16 %v814, %v804
    %v1035 = vpack.c.b16 %v815, %v805
    %v1036 = vpack.c.b16 %v826, %v816
    %v1037 = vpack.c.b16 %v827, %v817
    %v1038 = vpack.c.b16 %v828, %v818
    %v1039 = vpack.c.b16 %v829, %v819
    %v1040 = vpack.c.b16 %v830, %v820
    %v1041 = vpack.c.b16 %v831, %v821
    %v1042 = vpack.c.b16 %v832, %v822
    %v1043 = vpack.c.b16 %v833, %v823
    %v1044 = vpack.c.b16 %v834, %v824
    %v1045 = vpack.c.b16 %v835, %v825
    %v1046 = vpack.c.b16 %v846, %v836
    %v1047 = vpack.c.b16 %v847, %v837
    %v1048 = vpack.c.b16 %v848, %v838
    %v1049 = vpack.c.b16 %v849, %v839
    %v1050 = vpack.c.b16 %v850, %v840
    %v1051 = vpack.c.b16 %v851, %v841
    %v1052 = vpack.c.b16 %v852, %v842
    %v1053 = vpack.c.b16 %v853, %v843
    %v1054 = vpack.c.b16 %v854, %v844
    %v1055 = vpack.c.b16 %v855, %v845
    %v1056 = vpack.c.b16 %v866, %v856
    %v1057 = vpack.c.b16 %v867, %v857
    %v1058 = vpack.c.b16 %v868, %v858
    %v1059 = vpack.c.b16 %v869, %v859
    %v1060 = vpack.c.b16 %v870, %v860
    %v1061 = vpack.c.b16 %v871, %v861
    %v1062 = vpack.c.b16 %v872, %v862
    %v1063 = vpack.c.b16 %v873, %v863
    %v1064 = vpack.c.b16 %v874, %v864
    %v1065 = vpack.c.b16 %v875, %v865
    %v1066 = vpack.c.b16 %v886, %v876
    %v1067 = vpack.c.b16 %v887, %v877
    %v1068 = vpack.c.b16 %v888, %v878
    %v1069 = vpack.c.b16 %v889, %v879
    %v1070 = vpack.c.b16 %v890, %v880
    %v1071 = vpack.c.b16 %v891, %v881
    %v1072 = vpack.c.b16 %v892, %v882
    %v1073 = vpack.c.b16 %v893, %v883
    %v1074 = vpack.c.b16 %v894, %v884
    %v1075 = vpack.c.b16 %v895, %v885
    %vm1256 = vcmask 261120
    %v1258 = vsel %vm1256, %v151, 0
    %1260 = vmatpush.bf16.msra.mxu0 %v966
    %1261 = vmatpush.bf16.msra.mxu0 %v956
    %1262 = vmatpush.bf16.msra.mxu0 %v946
    %1263 = vmatpush.bf16.msra.mxu0 %v936
    %1264 = vmatpush.bf16.msra.mxu0 %v926
    %1265 = vmatpush.bf16.msra.mxu0 %v916
    %1266 = vmatpush.bf16.msra.mxu0 %v906
    %1267 = vmatpush.bf16.msra.mxu0 %v896
    %1268 = vmatmul.bf16.gmra.mxu0 %v149
    %v1269 = vpop.f32.mrf.mxu0
    %v1270 = vadd.f32 %v336, %v1269
    %v1271 = vpop.f32.mrf.mxu0
    %1272 = vdwg.mxu0
    %1273 = vmatpush.bf16.msra.mxu0 %v1046
    %1274 = vmatpush.bf16.msra.mxu0 %v1036
    %1275 = vmatpush.bf16.msra.mxu0 %v1026
    %1276 = vmatpush.bf16.msra.mxu0 %v1016
    %1277 = vmatpush.bf16.msra.mxu0 %v1006
    %1278 = vmatpush.bf16.msra.mxu0 %v996
    %1279 = vmatpush.bf16.msra.mxu0 %v986
    %1280 = vmatpush.bf16.msra.mxu0 %v976
    %1281 = vmatmul.bf16.gmra.mxu0 %v150
    %v1282 = vpop.f32.mrf.mxu0
    %v1283 = vadd.f32 %v1270, %v1282
    %v1284 = vpop.f32.mrf.mxu0
    %1285 = vdwg.mxu0
    %1286 = vmatpush.bf16.msra.mxu0 0
    %1287 = vmatpush.bf16.msra.mxu0 0
    %1288 = vmatpush.bf16.msra.mxu0 0
    %1289 = vmatpush.bf16.msra.mxu0 0
    %1290 = vmatpush.bf16.msra.mxu0 0
    %1291 = vmatpush.bf16.msra.mxu0 0
    %1292 = vmatpush.bf16.msra.mxu0 %v1066
    %1293 = vmatpush.bf16.msra.mxu0 %v1056
    %1294 = vmatmul.bf16.gmra.mxu0 %v1258
    %v1295 = vpop.f32.mrf.mxu0
    %v1296 = vadd.f32 %v1283, %v1295
    %v1297 = vpop.f32.mrf.mxu0
    %1298 = vdwg.mxu0
    %1299 = vmatpush.bf16.msra.mxu0 %v967
    %1300 = vmatpush.bf16.msra.mxu0 %v957
    %1301 = vmatpush.bf16.msra.mxu0 %v947
    %1302 = vmatpush.bf16.msra.mxu0 %v937
    %1303 = vmatpush.bf16.msra.mxu0 %v927
    %1304 = vmatpush.bf16.msra.mxu0 %v917
    %1305 = vmatpush.bf16.msra.mxu0 %v907
    %1306 = vmatpush.bf16.msra.mxu0 %v897
    %1307 = vmatmul.bf16.gmra.mxu0 %v149
    %v1308 = vpop.f32.mrf.mxu0
    %v1309 = vadd.f32 %v337, %v1308
    %v1310 = vpop.f32.mrf.mxu0
    %1311 = vdwg.mxu0
    %1312 = vmatpush.bf16.msra.mxu0 %v1047
    %1313 = vmatpush.bf16.msra.mxu0 %v1037
    %1314 = vmatpush.bf16.msra.mxu0 %v1027
    %1315 = vmatpush.bf16.msra.mxu0 %v1017
    %1316 = vmatpush.bf16.msra.mxu0 %v1007
    %1317 = vmatpush.bf16.msra.mxu0 %v997
    %1318 = vmatpush.bf16.msra.mxu0 %v987
    %1319 = vmatpush.bf16.msra.mxu0 %v977
    %1320 = vmatmul.bf16.gmra.mxu0 %v150
    %v1321 = vpop.f32.mrf.mxu0
    %v1322 = vadd.f32 %v1309, %v1321
    %v1323 = vpop.f32.mrf.mxu0
    %1324 = vdwg.mxu0
    %1325 = vmatpush.bf16.msra.mxu0 0
    %1326 = vmatpush.bf16.msra.mxu0 0
    %1327 = vmatpush.bf16.msra.mxu0 0
    %1328 = vmatpush.bf16.msra.mxu0 0
    %1329 = vmatpush.bf16.msra.mxu0 0
    %1330 = vmatpush.bf16.msra.mxu0 0
    %1331 = vmatpush.bf16.msra.mxu0 %v1067
    %1332 = vmatpush.bf16.msra.mxu0 %v1057
    %1333 = vmatmul.bf16.gmra.mxu0 %v1258
    %v1334 = vpop.f32.mrf.mxu0
    %v1335 = vadd.f32 %v1322, %v1334
    %v1336 = vpop.f32.mrf.mxu0
    %1337 = vdwg.mxu0
    %1338 = vmatpush.bf16.msra.mxu0 %v968
    %1339 = vmatpush.bf16.msra.mxu0 %v958
    %1340 = vmatpush.bf16.msra.mxu0 %v948
    %1341 = vmatpush.bf16.msra.mxu0 %v938
    %1342 = vmatpush.bf16.msra.mxu0 %v928
    %1343 = vmatpush.bf16.msra.mxu0 %v918
    %1344 = vmatpush.bf16.msra.mxu0 %v908
    %1345 = vmatpush.bf16.msra.mxu0 %v898
    %1346 = vmatmul.bf16.gmra.mxu0 %v149
    %v1347 = vpop.f32.mrf.mxu0
    %v1348 = vadd.f32 %v338, %v1347
    %v1349 = vpop.f32.mrf.mxu0
    %1350 = vdwg.mxu0
    %1351 = vmatpush.bf16.msra.mxu0 %v1048
    %1352 = vmatpush.bf16.msra.mxu0 %v1038
    %1353 = vmatpush.bf16.msra.mxu0 %v1028
    %1354 = vmatpush.bf16.msra.mxu0 %v1018
    %1355 = vmatpush.bf16.msra.mxu0 %v1008
    %1356 = vmatpush.bf16.msra.mxu0 %v998
    %1357 = vmatpush.bf16.msra.mxu0 %v988
    %1358 = vmatpush.bf16.msra.mxu0 %v978
    %1359 = vmatmul.bf16.gmra.mxu0 %v150
    %v1360 = vpop.f32.mrf.mxu0
    %v1361 = vadd.f32 %v1348, %v1360
    %v1362 = vpop.f32.mrf.mxu0
    %1363 = vdwg.mxu0
    %1364 = vmatpush.bf16.msra.mxu0 0
    %1365 = vmatpush.bf16.msra.mxu0 0
    %1366 = vmatpush.bf16.msra.mxu0 0
    %1367 = vmatpush.bf16.msra.mxu0 0
    %1368 = vmatpush.bf16.msra.mxu0 0
    %1369 = vmatpush.bf16.msra.mxu0 0
    %1370 = vmatpush.bf16.msra.mxu0 %v1068
    %1371 = vmatpush.bf16.msra.mxu0 %v1058
    %1372 = vmatmul.bf16.gmra.mxu0 %v1258
    %v1373 = vpop.f32.mrf.mxu0
    %v1374 = vadd.f32 %v1361, %v1373
    %v1375 = vpop.f32.mrf.mxu0
    %1376 = vdwg.mxu0
    %1377 = vmatpush.bf16.msra.mxu0 %v969
    %1378 = vmatpush.bf16.msra.mxu0 %v959
    %1379 = vmatpush.bf16.msra.mxu0 %v949
    %1380 = vmatpush.bf16.msra.mxu0 %v939
    %1381 = vmatpush.bf16.msra.mxu0 %v929
    %1382 = vmatpush.bf16.msra.mxu0 %v919
    %1383 = vmatpush.bf16.msra.mxu0 %v909
    %1384 = vmatpush.bf16.msra.mxu0 %v899
    %1385 = vmatmul.bf16.gmra.mxu0 %v149
    %v1386 = vpop.f32.mrf.mxu0
    %v1387 = vadd.f32 %v339, %v1386
    %v1388 = vpop.f32.mrf.mxu0
    %1389 = vdwg.mxu0
    %1390 = vmatpush.bf16.msra.mxu0 %v1049
    %1391 = vmatpush.bf16.msra.mxu0 %v1039
    %1392 = vmatpush.bf16.msra.mxu0 %v1029
    %1393 = vmatpush.bf16.msra.mxu0 %v1019
    %1394 = vmatpush.bf16.msra.mxu0 %v1009
    %1395 = vmatpush.bf16.msra.mxu0 %v999
    %1396 = vmatpush.bf16.msra.mxu0 %v989
    %1397 = vmatpush.bf16.msra.mxu0 %v979
    %1398 = vmatmul.bf16.gmra.mxu0 %v150
    %v1399 = vpop.f32.mrf.mxu0
    %v1400 = vadd.f32 %v1387, %v1399
    %v1401 = vpop.f32.mrf.mxu0
    %1402 = vdwg.mxu0
    %1403 = vmatpush.bf16.msra.mxu0 0
    %1404 = vmatpush.bf16.msra.mxu0 0
    %1405 = vmatpush.bf16.msra.mxu0 0
    %1406 = vmatpush.bf16.msra.mxu0 0
    %1407 = vmatpush.bf16.msra.mxu0 0
    %1408 = vmatpush.bf16.msra.mxu0 0
    %1409 = vmatpush.bf16.msra.mxu0 %v1069
    %1410 = vmatpush.bf16.msra.mxu0 %v1059
    %1411 = vmatmul.bf16.gmra.mxu0 %v1258
    %v1412 = vpop.f32.mrf.mxu0
    %v1413 = vadd.f32 %v1400, %v1412
    %v1414 = vpop.f32.mrf.mxu0
    %1415 = vdwg.mxu0
    %1416 = vmatpush.bf16.msra.mxu0 %v970
    %1417 = vmatpush.bf16.msra.mxu0 %v960
    %1418 = vmatpush.bf16.msra.mxu0 %v950
    %1419 = vmatpush.bf16.msra.mxu0 %v940
    %1420 = vmatpush.bf16.msra.mxu0 %v930
    %1421 = vmatpush.bf16.msra.mxu0 %v920
    %1422 = vmatpush.bf16.msra.mxu0 %v910
    %1423 = vmatpush.bf16.msra.mxu0 %v900
    %1424 = vmatmul.bf16.gmra.mxu0 %v149
    %v1425 = vpop.f32.mrf.mxu0
    %v1426 = vadd.f32 %v340, %v1425
    %v1427 = vpop.f32.mrf.mxu0
    %1428 = vdwg.mxu0
    %1429 = vmatpush.bf16.msra.mxu0 %v1050
    %1430 = vmatpush.bf16.msra.mxu0 %v1040
    %1431 = vmatpush.bf16.msra.mxu0 %v1030
    %1432 = vmatpush.bf16.msra.mxu0 %v1020
    %1433 = vmatpush.bf16.msra.mxu0 %v1010
    %1434 = vmatpush.bf16.msra.mxu0 %v1000
    %1435 = vmatpush.bf16.msra.mxu0 %v990
    %1436 = vmatpush.bf16.msra.mxu0 %v980
    %1437 = vmatmul.bf16.gmra.mxu0 %v150
    %v1438 = vpop.f32.mrf.mxu0
    %v1439 = vadd.f32 %v1426, %v1438
    %v1440 = vpop.f32.mrf.mxu0
    %1441 = vdwg.mxu0
    %1442 = vmatpush.bf16.msra.mxu0 0
    %1443 = vmatpush.bf16.msra.mxu0 0
    %1444 = vmatpush.bf16.msra.mxu0 0
    %1445 = vmatpush.bf16.msra.mxu0 0
    %1446 = vmatpush.bf16.msra.mxu0 0
    %1447 = vmatpush.bf16.msra.mxu0 0
    %1448 = vmatpush.bf16.msra.mxu0 %v1070
    %1449 = vmatpush.bf16.msra.mxu0 %v1060
    %1450 = vmatmul.bf16.gmra.mxu0 %v1258
    %v1451 = vpop.f32.mrf.mxu0
    %v1452 = vadd.f32 %v1439, %v1451
    %v1453 = vpop.f32.mrf.mxu0
    %1454 = vdwg.mxu0
    %1455 = vmatpush.bf16.msra.mxu0 %v971
    %1456 = vmatpush.bf16.msra.mxu0 %v961
    %1457 = vmatpush.bf16.msra.mxu0 %v951
    %1458 = vmatpush.bf16.msra.mxu0 %v941
    %1459 = vmatpush.bf16.msra.mxu0 %v931
    %1460 = vmatpush.bf16.msra.mxu0 %v921
    %1461 = vmatpush.bf16.msra.mxu0 %v911
    %1462 = vmatpush.bf16.msra.mxu0 %v901
    %1463 = vmatmul.bf16.gmra.mxu0 %v149
    %v1464 = vpop.f32.mrf.mxu0
    %v1465 = vadd.f32 %v341, %v1464
    %v1466 = vpop.f32.mrf.mxu0
    %1467 = vdwg.mxu0
    %1468 = vmatpush.bf16.msra.mxu0 %v1051
    %1469 = vmatpush.bf16.msra.mxu0 %v1041
    %1470 = vmatpush.bf16.msra.mxu0 %v1031
    %1471 = vmatpush.bf16.msra.mxu0 %v1021
    %1472 = vmatpush.bf16.msra.mxu0 %v1011
    %1473 = vmatpush.bf16.msra.mxu0 %v1001
    %1474 = vmatpush.bf16.msra.mxu0 %v991
    %1475 = vmatpush.bf16.msra.mxu0 %v981
    %1476 = vmatmul.bf16.gmra.mxu0 %v150
    %v1477 = vpop.f32.mrf.mxu0
    %v1478 = vadd.f32 %v1465, %v1477
    %v1479 = vpop.f32.mrf.mxu0
    %1480 = vdwg.mxu0
    %1481 = vmatpush.bf16.msra.mxu0 0
    %1482 = vmatpush.bf16.msra.mxu0 0
    %1483 = vmatpush.bf16.msra.mxu0 0
    %1484 = vmatpush.bf16.msra.mxu0 0
    %1485 = vmatpush.bf16.msra.mxu0 0
    %1486 = vmatpush.bf16.msra.mxu0 0
    %1487 = vmatpush.bf16.msra.mxu0 %v1071
    %1488 = vmatpush.bf16.msra.mxu0 %v1061
    %1489 = vmatmul.bf16.gmra.mxu0 %v1258
    %v1490 = vpop.f32.mrf.mxu0
    %v1491 = vadd.f32 %v1478, %v1490
    %v1492 = vpop.f32.mrf.mxu0
    %1493 = vdwg.mxu0
    %1494 = vmatpush.bf16.msra.mxu0 %v972
    %1495 = vmatpush.bf16.msra.mxu0 %v962
    %1496 = vmatpush.bf16.msra.mxu0 %v952
    %1497 = vmatpush.bf16.msra.mxu0 %v942
    %1498 = vmatpush.bf16.msra.mxu0 %v932
    %1499 = vmatpush.bf16.msra.mxu0 %v922
    %1500 = vmatpush.bf16.msra.mxu0 %v912
    %1501 = vmatpush.bf16.msra.mxu0 %v902
    %1502 = vmatmul.bf16.gmra.mxu0 %v149
    %v1503 = vpop.f32.mrf.mxu0
    %v1504 = vadd.f32 %v342, %v1503
    %v1505 = vpop.f32.mrf.mxu0
    %1506 = vdwg.mxu0
    %1507 = vmatpush.bf16.msra.mxu0 %v1052
    %1508 = vmatpush.bf16.msra.mxu0 %v1042
    %1509 = vmatpush.bf16.msra.mxu0 %v1032
    %1510 = vmatpush.bf16.msra.mxu0 %v1022
    %1511 = vmatpush.bf16.msra.mxu0 %v1012
    %1512 = vmatpush.bf16.msra.mxu0 %v1002
    %1513 = vmatpush.bf16.msra.mxu0 %v992
    %1514 = vmatpush.bf16.msra.mxu0 %v982
    %1515 = vmatmul.bf16.gmra.mxu0 %v150
    %v1516 = vpop.f32.mrf.mxu0
    %v1517 = vadd.f32 %v1504, %v1516
    %v1518 = vpop.f32.mrf.mxu0
    %1519 = vdwg.mxu0
    %1520 = vmatpush.bf16.msra.mxu0 0
    %1521 = vmatpush.bf16.msra.mxu0 0
    %1522 = vmatpush.bf16.msra.mxu0 0
    %1523 = vmatpush.bf16.msra.mxu0 0
    %1524 = vmatpush.bf16.msra.mxu0 0
    %1525 = vmatpush.bf16.msra.mxu0 0
    %1526 = vmatpush.bf16.msra.mxu0 %v1072
    %1527 = vmatpush.bf16.msra.mxu0 %v1062
    %1528 = vmatmul.bf16.gmra.mxu0 %v1258
    %v1529 = vpop.f32.mrf.mxu0
    %v1530 = vadd.f32 %v1517, %v1529
    %v1531 = vpop.f32.mrf.mxu0
    %1532 = vdwg.mxu0
    %1533 = vmatpush.bf16.msra.mxu0 %v973
    %1534 = vmatpush.bf16.msra.mxu0 %v963
    %1535 = vmatpush.bf16.msra.mxu0 %v953
    %1536 = vmatpush.bf16.msra.mxu0 %v943
    %1537 = vmatpush.bf16.msra.mxu0 %v933
    %1538 = vmatpush.bf16.msra.mxu0 %v923
    %1539 = vmatpush.bf16.msra.mxu0 %v913
    %1540 = vmatpush.bf16.msra.mxu0 %v903
    %1541 = vmatmul.bf16.gmra.mxu0 %v149
    %v1542 = vpop.f32.mrf.mxu0
    %v1543 = vadd.f32 %v343, %v1542
    %v1544 = vpop.f32.mrf.mxu0
    %1545 = vdwg.mxu0
    %1546 = vmatpush.bf16.msra.mxu0 %v1053
    %1547 = vmatpush.bf16.msra.mxu0 %v1043
    %1548 = vmatpush.bf16.msra.mxu0 %v1033
    %1549 = vmatpush.bf16.msra.mxu0 %v1023
    %1550 = vmatpush.bf16.msra.mxu0 %v1013
    %1551 = vmatpush.bf16.msra.mxu0 %v1003
    %1552 = vmatpush.bf16.msra.mxu0 %v993
    %1553 = vmatpush.bf16.msra.mxu0 %v983
    %1554 = vmatmul.bf16.gmra.mxu0 %v150
    %v1555 = vpop.f32.mrf.mxu0
    %v1556 = vadd.f32 %v1543, %v1555
    %v1557 = vpop.f32.mrf.mxu0
    %1558 = vdwg.mxu0
    %1559 = vmatpush.bf16.msra.mxu0 0
    %1560 = vmatpush.bf16.msra.mxu0 0
    %1561 = vmatpush.bf16.msra.mxu0 0
    %1562 = vmatpush.bf16.msra.mxu0 0
    %1563 = vmatpush.bf16.msra.mxu0 0
    %1564 = vmatpush.bf16.msra.mxu0 0
    %1565 = vmatpush.bf16.msra.mxu0 %v1073
    %1566 = vmatpush.bf16.msra.mxu0 %v1063
    %1567 = vmatmul.bf16.gmra.mxu0 %v1258
    %v1568 = vpop.f32.mrf.mxu0
    %v1569 = vadd.f32 %v1556, %v1568
    %v1570 = vpop.f32.mrf.mxu0
    %1571 = vdwg.mxu0
    %1572 = vmatpush.bf16.msra.mxu0 %v974
    %1573 = vmatpush.bf16.msra.mxu0 %v964
    %1574 = vmatpush.bf16.msra.mxu0 %v954
    %1575 = vmatpush.bf16.msra.mxu0 %v944
    %1576 = vmatpush.bf16.msra.mxu0 %v934
    %1577 = vmatpush.bf16.msra.mxu0 %v924
    %1578 = vmatpush.bf16.msra.mxu0 %v914
    %1579 = vmatpush.bf16.msra.mxu0 %v904
    %1580 = vmatmul.bf16.gmra.mxu0 %v149
    %v1581 = vpop.f32.mrf.mxu0
    %v1582 = vadd.f32 %v344, %v1581
    %v1583 = vpop.f32.mrf.mxu0
    %1584 = vdwg.mxu0
    %1585 = vmatpush.bf16.msra.mxu0 %v1054
    %1586 = vmatpush.bf16.msra.mxu0 %v1044
    %1587 = vmatpush.bf16.msra.mxu0 %v1034
    %1588 = vmatpush.bf16.msra.mxu0 %v1024
    %1589 = vmatpush.bf16.msra.mxu0 %v1014
    %1590 = vmatpush.bf16.msra.mxu0 %v1004
    %1591 = vmatpush.bf16.msra.mxu0 %v994
    %1592 = vmatpush.bf16.msra.mxu0 %v984
    %1593 = vmatmul.bf16.gmra.mxu0 %v150
    %v1594 = vpop.f32.mrf.mxu0
    %v1595 = vadd.f32 %v1582, %v1594
    %v1596 = vpop.f32.mrf.mxu0
    %1597 = vdwg.mxu0
    %1598 = vmatpush.bf16.msra.mxu0 0
    %1599 = vmatpush.bf16.msra.mxu0 0
    %1600 = vmatpush.bf16.msra.mxu0 0
    %1601 = vmatpush.bf16.msra.mxu0 0
    %1602 = vmatpush.bf16.msra.mxu0 0
    %1603 = vmatpush.bf16.msra.mxu0 0
    %1604 = vmatpush.bf16.msra.mxu0 %v1074
    %1605 = vmatpush.bf16.msra.mxu0 %v1064
    %1606 = vmatmul.bf16.gmra.mxu0 %v1258
    %v1607 = vpop.f32.mrf.mxu0
    %v1608 = vadd.f32 %v1595, %v1607
    %v1609 = vpop.f32.mrf.mxu0
    %1610 = vdwg.mxu0
    %1611 = vmatpush.bf16.msra.mxu0 %v975
    %1612 = vmatpush.bf16.msra.mxu0 %v965
    %1613 = vmatpush.bf16.msra.mxu0 %v955
    %1614 = vmatpush.bf16.msra.mxu0 %v945
    %1615 = vmatpush.bf16.msra.mxu0 %v935
    %1616 = vmatpush.bf16.msra.mxu0 %v925
    %1617 = vmatpush.bf16.msra.mxu0 %v915
    %1618 = vmatpush.bf16.msra.mxu0 %v905
    %1619 = vmatmul.bf16.gmra.mxu0 %v149
    %v1620 = vpop.f32.mrf.mxu0
    %v1621 = vadd.f32 %v345, %v1620
    %v1622 = vpop.f32.mrf.mxu0
    %1623 = vdwg.mxu0
    %1624 = vmatpush.bf16.msra.mxu0 %v1055
    %1625 = vmatpush.bf16.msra.mxu0 %v1045
    %1626 = vmatpush.bf16.msra.mxu0 %v1035
    %1627 = vmatpush.bf16.msra.mxu0 %v1025
    %1628 = vmatpush.bf16.msra.mxu0 %v1015
    %1629 = vmatpush.bf16.msra.mxu0 %v1005
    %1630 = vmatpush.bf16.msra.mxu0 %v995
    %1631 = vmatpush.bf16.msra.mxu0 %v985
    %1632 = vmatmul.bf16.gmra.mxu0 %v150
    %v1633 = vpop.f32.mrf.mxu0
    %v1634 = vadd.f32 %v1621, %v1633
    %v1635 = vpop.f32.mrf.mxu0
    %1636 = vdwg.mxu0
    %1637 = vmatpush.bf16.msra.mxu0 0
    %1638 = vmatpush.bf16.msra.mxu0 0
    %1639 = vmatpush.bf16.msra.mxu0 0
    %1640 = vmatpush.bf16.msra.mxu0 0
    %1641 = vmatpush.bf16.msra.mxu0 0
    %1642 = vmatpush.bf16.msra.mxu0 0
    %1643 = vmatpush.bf16.msra.mxu0 %v1075
    %1644 = vmatpush.bf16.msra.mxu0 %v1065
    %1645 = vmatmul.bf16.gmra.mxu0 %v1258
    %v1646 = vpop.f32.mrf.mxu0
    %v1647 = vadd.f32 %v1634, %v1646
    %v1648 = vpop.f32.mrf.mxu0
    %1649 = vdwg.mxu0
    %v1650 = vld [vmem:[%s1] sm:$0xff]
    %v1651 = vld [vmem:[#allocation6] sm:$0xf]
    %v1652 = vpack.c.bf16 %v1650, %v1650
    %vm1653 = vcmask 64512
    %v1655 = vsel %vm1653, %v1652, 0
    %v1658 = vsel %vm94, %v1651, 0
    %1660 = vmatpush.bf16.msra.mxu0 0
    %1661 = vmatpush.bf16.msra.mxu0 0
    %1662 = vmatpush.bf16.msra.mxu0 0
    %1663 = vmatpush.bf16.msra.mxu0 0
    %1664 = vmatpush.bf16.msra.mxu0 0
    %1665 = vmatpush.bf16.msra.mxu0 0
    %1666 = vmatpush.bf16.msra.mxu0 0
    %1667 = vmatpush.bf16.msra.mxu0 %v1658
    %1668 = vmatmul.bf16.gmra.mxu0 %v1655
    %v1669 = vpop.f32.mrf.mxu0
    %v1670 = vadd.f32 0.0, %v1669
    %v1671 = vpop.f32.mrf.mxu0
    %1672 = vdwg.mxu0
    %v1673 = vmul.f32 %v1296, %v1670
    %v1674 = vld [vmem:[#allocation6 + $0x30] sm:$0xf]
    %v1675 = vld [vmem:[#allocation6 + $0x38] sm:$0xf]
    %v1676 = vld [vmem:[#allocation6 + $0x40] sm:$0xf]
    %v1677 = vld [vmem:[#allocation6 + $0x48] sm:$0xf]
    %v1678 = vld [vmem:[#allocation6 + $0x50] sm:$0xf]
    %v1679 = vld [vmem:[#allocation6 + $0x58] sm:$0xf]
    %v1680 = vld [vmem:[#allocation6 + $0x60] sm:$0xf]
    %v1681 = vld [vmem:[#allocation6 + $0x68] sm:$0xf]
    %v1682 = vld [vmem:[#allocation6 + $0x70] sm:$0xf]
    %v1683 = vld [vmem:[#allocation6 + $0x78] sm:$0xf]
    %v1684 = vld [vmem:[#allocation6 + $0x80] sm:$0xf]
    %v1685 = vld [vmem:[#allocation6 + $0x88] sm:$0xf]
    %v1686 = vld [vmem:[#allocation6 + $0x90] sm:$0xf]
    %v1687 = vld [vmem:[#allocation6 + $0x98] sm:$0xf]
    %v1688 = vld [vmem:[#allocation6 + $0xa0] sm:$0xf]
    %v1689 = vld [vmem:[#allocation6 + $0xa8] sm:$0xf]
    %v1690 = vpack.c.bf16 %v1673, %v1673
    %v1707 = vunpack.c.l.b16 %v1674
    %v1708 = vunpack.c.l.b16 %v1675
    %v1709 = vunpack.c.l.b16 %v1676
    %v1710 = vunpack.c.l.b16 %v1677
    %v1711 = vunpack.c.l.b16 %v1678
    %v1712 = vunpack.c.l.b16 %v1679
    %v1713 = vunpack.c.l.b16 %v1680
    %v1714 = vunpack.c.l.b16 %v1681
    %v1715 = vunpack.c.l.b16 %v1682
    %v1716 = vunpack.c.l.b16 %v1683
    %v1717 = vunpack.c.l.b16 %v1684
    %v1718 = vunpack.c.l.b16 %v1685
    %v1719 = vunpack.c.l.b16 %v1686
    %v1720 = vunpack.c.l.b16 %v1687
    %v1721 = vunpack.c.l.b16 %v1688
    %v1722 = vunpack.c.l.b16 %v1689
    %v1723 = vpack.c.b16 %v1708, %v1707
    %v1724 = vpack.c.b16 %v1710, %v1709
    %v1725 = vpack.c.b16 %v1712, %v1711
    %v1726 = vpack.c.b16 %v1714, %v1713
    %v1727 = vpack.c.b16 %v1716, %v1715
    %v1728 = vpack.c.b16 %v1718, %v1717
    %v1729 = vpack.c.b16 %v1720, %v1719
    %v1730 = vpack.c.b16 %v1722, %v1721
    %1739 = vmatpush.bf16.msra.mxu0 %v1730
    %1740 = vmatpush.bf16.msra.mxu0 %v1729
    %1741 = vmatpush.bf16.msra.mxu0 %v1728
    %1742 = vmatpush.bf16.msra.mxu0 %v1727
    %1743 = vmatpush.bf16.msra.mxu0 %v1726
    %1744 = vmatpush.bf16.msra.mxu0 %v1725
    %1745 = vmatpush.bf16.msra.mxu0 %v1724
    %1746 = vmatpush.bf16.msra.mxu0 %v1723
    %1747 = vmatmul.bf16.gmra.mxu0 %v1690
    %v1748 = vpop.f32.mrf.mxu0
    %v1749 = vadd.f32 0.0, %v1748
    %v1750 = vpop.f32.mrf.mxu0
    %1751 = vdwg.mxu0
    %v1752 = vmul.f32 %v1749, %v1374
    %v1753 = vadd.f32 %v1752, %v1335
    %v1754 = vmax.f32 %v1753, 0.0
    %v1755 = vld [vmem:[#allocation6 + $0x10] sm:$0xff]
    %v1756 = vld [vmem:[#allocation6 + $0x18] sm:$0xff]
    %v1757 = vpack.c.bf16 %v1754, %v1754
    %v1760 = vunpack.c.l.b16 %v1755
    %v1761 = vunpack.c.h.b16 %v1755
    %v1762 = vunpack.c.l.b16 %v1756
    %v1763 = vunpack.c.h.b16 %v1756
    %v1764 = vpack.c.b16 %v1762, %v1760
    %v1765 = vpack.c.b16 %v1763, %v1761
    %vm1768 = vcmask 130048
    %v1770 = vsel %vm1768, %v1757, 0
    %1772 = vmatpush.bf16.msra.mxu0 0
    %1773 = vmatpush.bf16.msra.mxu0 0
    %1774 = vmatpush.bf16.msra.mxu0 0
    %1775 = vmatpush.bf16.msra.mxu0 0
    %1776 = vmatpush.bf16.msra.mxu0 0
    %1777 = vmatpush.bf16.msra.mxu0 0
    %1778 = vmatpush.bf16.msra.mxu0 0
    %1779 = vmatpush.bf16.msra.mxu0 %v1764
    %1780 = vmatmul.bf16.gmra.mxu0 %v1770
    %v1781 = vpop.f32.mrf.mxu0
    %v1782 = vadd.f32 0.0, %v1781
    %v1783 = vpop.f32.mrf.mxu0
    %1784 = vdwg.mxu0
    %1785 = vmatpush.bf16.msra.mxu0 0
    %1786 = vmatpush.bf16.msra.mxu0 0
    %1787 = vmatpush.bf16.msra.mxu0 0
    %1788 = vmatpush.bf16.msra.mxu0 0
    %1789 = vmatpush.bf16.msra.mxu0 0
    %1790 = vmatpush.bf16.msra.mxu0 0
    %1791 = vmatpush.bf16.msra.mxu0 0
    %1792 = vmatpush.bf16.msra.mxu0 %v1765
    %1793 = vmatmul.bf16.gmra.mxu0 %v1770
    %v1794 = vpop.f32.mrf.mxu0
    %v1795 = vadd.f32 0.0, %v1794
    %v1796 = vpop.f32.mrf.mxu0
    %1797 = vdwg.mxu0
    %v1798 = vmul.f32 %v1413, %v1782
    %v1799 = vmul.f32 %v1452, %v1795
    %v1800 = vld [vmem:[#allocation6 + $0xb0] sm:$0xf]
    %v1801 = vld [vmem:[#allocation6 + $0xb8] sm:$0xf]
    %v1802 = vld [vmem:[#allocation6 + $0xc0] sm:$0xf]
    %v1803 = vld [vmem:[#allocation6 + $0xc8] sm:$0xf]
    %v1804 = vld [vmem:[#allocation6 + $0xd0] sm:$0xf]
    %v1805 = vld [vmem:[#allocation6 + $0xd8] sm:$0xf]
    %v1806 = vld [vmem:[#allocation6 + $0xe0] sm:$0xf]
    %v1807 = vld [vmem:[#allocation6 + $0xe8] sm:$0xf]
    %v1808 = vld [vmem:[#allocation6 + $0xf0] sm:$0xf]
    %v1809 = vld [vmem:[#allocation6 + $0xf8] sm:$0xf]
    %v1810 = vld [vmem:[#allocation6 + $0x100] sm:$0xf]
    %v1811 = vld [vmem:[#allocation6 + $0x108] sm:$0xf]
    %v1812 = vld [vmem:[#allocation6 + $0x110] sm:$0xf]
    %v1813 = vld [vmem:[#allocation6 + $0x118] sm:$0xf]
    %v1814 = vld [vmem:[#allocation6 + $0x120] sm:$0xf]
    %v1815 = vld [vmem:[#allocation6 + $0x128] sm:$0xf]
    %v1816 = vld [vmem:[#allocation6 + $0x130] sm:$0xf]
    %v1817 = vld [vmem:[#allocation6 + $0x138] sm:$0xf]
    %v1818 = vld [vmem:[#allocation6 + $0x140] sm:$0xf]
    %v1819 = vld [vmem:[#allocation6 + $0x148] sm:$0xf]
    %v1820 = vld [vmem:[#allocation6 + $0x150] sm:$0xf]
    %v1821 = vld [vmem:[#allocation6 + $0x158] sm:$0xf]
    %v1822 = vld [vmem:[#allocation6 + $0x160] sm:$0xf]
    %v1823 = vld [vmem:[#allocation6 + $0x168] sm:$0xf]
    %v1824 = vld [vmem:[#allocation6 + $0x170] sm:$0xf]
    %v1825 = vld [vmem:[#allocation6 + $0x178] sm:$0xf]
    %v1826 = vld [vmem:[#allocation6 + $0x180] sm:$0xf]
    %v1827 = vld [vmem:[#allocation6 + $0x188] sm:$0xf]
    %v1828 = vld [vmem:[#allocation6 + $0x190] sm:$0xf]
    %v1829 = vld [vmem:[#allocation6 + $0x198] sm:$0xf]
    %v1830 = vld [vmem:[#allocation6 + $0x1a0] sm:$0xf]
    %v1831 = vld [vmem:[#allocation6 + $0x1a8] sm:$0xf]
    %v1832 = vpack.c.bf16 %v1798, %v1798
    %v1833 = vpack.c.bf16 %v1799, %v1799
    %v1866 = vunpack.c.l.b16 %v1800
    %v1867 = vunpack.c.l.b16 %v1801
    %v1868 = vunpack.c.l.b16 %v1802
    %v1869 = vunpack.c.l.b16 %v1803
    %v1870 = vunpack.c.l.b16 %v1804
    %v1871 = vunpack.c.l.b16 %v1805
    %v1872 = vunpack.c.l.b16 %v1806
    %v1873 = vunpack.c.l.b16 %v1807
    %v1874 = vunpack.c.l.b16 %v1808
    %v1875 = vunpack.c.l.b16 %v1809
    %v1876 = vunpack.c.l.b16 %v1810
    %v1877 = vunpack.c.l.b16 %v1811
    %v1878 = vunpack.c.l.b16 %v1812
    %v1879 = vunpack.c.l.b16 %v1813
    %v1880 = vunpack.c.l.b16 %v1814
    %v1881 = vunpack.c.l.b16 %v1815
    %v1882 = vunpack.c.l.b16 %v1816
    %v1883 = vunpack.c.l.b16 %v1817
    %v1884 = vunpack.c.l.b16 %v1818
    %v1885 = vunpack.c.l.b16 %v1819
    %v1886 = vunpack.c.l.b16 %v1820
    %v1887 = vunpack.c.l.b16 %v1821
    %v1888 = vunpack.c.l.b16 %v1822
    %v1889 = vunpack.c.l.b16 %v1823
    %v1890 = vunpack.c.l.b16 %v1824
    %v1891 = vunpack.c.l.b16 %v1825
    %v1892 = vunpack.c.l.b16 %v1826
    %v1893 = vunpack.c.l.b16 %v1827
    %v1894 = vunpack.c.l.b16 %v1828
    %v1895 = vunpack.c.l.b16 %v1829
    %v1896 = vunpack.c.l.b16 %v1830
    %v1897 = vunpack.c.l.b16 %v1831
    %v1898 = vpack.c.b16 %v1867, %v1866
    %v1899 = vpack.c.b16 %v1869, %v1868
    %v1900 = vpack.c.b16 %v1871, %v1870
    %v1901 = vpack.c.b16 %v1873, %v1872
    %v1902 = vpack.c.b16 %v1875, %v1874
    %v1903 = vpack.c.b16 %v1877, %v1876
    %v1904 = vpack.c.b16 %v1879, %v1878
    %v1905 = vpack.c.b16 %v1881, %v1880
    %v1906 = vpack.c.b16 %v1883, %v1882
    %v1907 = vpack.c.b16 %v1885, %v1884
    %v1908 = vpack.c.b16 %v1887, %v1886
    %v1909 = vpack.c.b16 %v1889, %v1888
    %v1910 = vpack.c.b16 %v1891, %v1890
    %v1911 = vpack.c.b16 %v1893, %v1892
    %v1912 = vpack.c.b16 %v1895, %v1894
    %v1913 = vpack.c.b16 %v1897, %v1896
    %1930 = vmatpush.bf16.msra.mxu0 %v1905
    %1931 = vmatpush.bf16.msra.mxu0 %v1904
    %1932 = vmatpush.bf16.msra.mxu0 %v1903
    %1933 = vmatpush.bf16.msra.mxu0 %v1902
    %1934 = vmatpush.bf16.msra.mxu0 %v1901
    %1935 = vmatpush.bf16.msra.mxu0 %v1900
    %1936 = vmatpush.bf16.msra.mxu0 %v1899
    %1937 = vmatpush.bf16.msra.mxu0 %v1898
    %1938 = vmatmul.bf16.gmra.mxu0 %v1832
    %v1939 = vpop.f32.mrf.mxu0
    %v1940 = vadd.f32 0.0, %v1939
    %v1941 = vpop.f32.mrf.mxu0
    %1942 = vdwg.mxu0
    %1943 = vmatpush.bf16.msra.mxu0 %v1913
    %1944 = vmatpush.bf16.msra.mxu0 %v1912
    %1945 = vmatpush.bf16.msra.mxu0 %v1911
    %1946 = vmatpush.bf16.msra.mxu0 %v1910
    %1947 = vmatpush.bf16.msra.mxu0 %v1909
    %1948 = vmatpush.bf16.msra.mxu0 %v1908
    %1949 = vmatpush.bf16.msra.mxu0 %v1907
    %1950 = vmatpush.bf16.msra.mxu0 %v1906
    %1951 = vmatmul.bf16.gmra.mxu0 %v1833
    %v1952 = vpop.f32.mrf.mxu0
    %v1953 = vadd.f32 %v1940, %v1952
    %v1954 = vpop.f32.mrf.mxu0
    %1955 = vdwg.mxu0
    %v1956 = vmul.f32 %v1953, %v1530
    %v1957 = vadd.f32 %v1956, %v1491
    %v1958 = vmax.f32 %v1957, 0.0
    %v1959 = vld [vmem:[#allocation6 + $0x20] sm:$0xf]
    %v1960 = vld [vmem:[#allocation6 + $0x28] sm:$0xf]
    %v1961 = vpack.c.bf16 %v1958, %v1958
    %v1964 = vunpack.c.l.b16 %v1959
    %v1965 = vunpack.c.l.b16 %v1960
    %v1966 = vpack.c.b16 %v1965, %v1964
    %v1969 = vsel %vm1768, %v1961, 0
    %1971 = vmatpush.bf16.msra.mxu0 0
    %1972 = vmatpush.bf16.msra.mxu0 0
    %1973 = vmatpush.bf16.msra.mxu0 0
    %1974 = vmatpush.bf16.msra.mxu0 0
    %1975 = vmatpush.bf16.msra.mxu0 0
    %1976 = vmatpush.bf16.msra.mxu0 0
    %1977 = vmatpush.bf16.msra.mxu0 0
    %1978 = vmatpush.bf16.msra.mxu0 %v1966
    %1979 = vmatmul.bf16.gmra.mxu0 %v1969
    %v1980 = vpop.f32.mrf.mxu0
    %v1981 = vadd.f32 0.0, %v1980
    %v1982 = vpop.f32.mrf.mxu0
    %1983 = vdwg.mxu0
    %v1984 = vmul.f32 %v1569, %v1981
    %v1985 = vld [vmem:[#allocation6 + $0x1b0] sm:$0xf]
    %v1986 = vld [vmem:[#allocation6 + $0x1b8] sm:$0xf]
    %v1987 = vld [vmem:[#allocation6 + $0x1c0] sm:$0xf]
    %v1988 = vld [vmem:[#allocation6 + $0x1c8] sm:$0xf]
    %v1989 = vld [vmem:[#allocation6 + $0x1d0] sm:$0xf]
    %v1990 = vld [vmem:[#allocation6 + $0x1d8] sm:$0xf]
    %v1991 = vld [vmem:[#allocation6 + $0x1e0] sm:$0xf]
    %v1992 = vld [vmem:[#allocation6 + $0x1e8] sm:$0xf]
    %v1993 = vpack.c.bf16 %v1984, %v1984
    %v2002 = vunpack.c.l.b16 %v1985
    %v2003 = vunpack.c.l.b16 %v1986
    %v2004 = vunpack.c.l.b16 %v1987
    %v2005 = vunpack.c.l.b16 %v1988
    %v2006 = vunpack.c.l.b16 %v1989
    %v2007 = vunpack.c.l.b16 %v1990
    %v2008 = vunpack.c.l.b16 %v1991
    %v2009 = vunpack.c.l.b16 %v1992
    %v2010 = vpack.c.b16 %v2003, %v2002
    %v2011 = vpack.c.b16 %v2005, %v2004
    %v2012 = vpack.c.b16 %v2007, %v2006
    %v2013 = vpack.c.b16 %v2009, %v2008
    %vm2018 = vcmask 523264
    %v2020 = vsel %vm2018, %v1993, 0
    %2022 = vmatpush.bf16.msra.mxu0 0
    %2023 = vmatpush.bf16.msra.mxu0 0
    %2024 = vmatpush.bf16.msra.mxu0 0
    %2025 = vmatpush.bf16.msra.mxu0 0
    %2026 = vmatpush.bf16.msra.mxu0 %v2013
    %2027 = vmatpush.bf16.msra.mxu0 %v2012
    %2028 = vmatpush.bf16.msra.mxu0 %v2011
    %2029 = vmatpush.bf16.msra.mxu0 %v2010
    %2030 = vmatmul.bf16.gmra.mxu0 %v2020
    %v2031 = vpop.f32.mrf.mxu0
    %v2032 = vadd.f32 0.0, %v2031
    %v2033 = vpop.f32.mrf.mxu0
    %2034 = vdwg.mxu0
    %v2035 = vmul.f32 %v2032, %v1647
    %v2036 = vadd.f32 %v2035, %v1608
    %vm2037 = vcmask 31744
    %2038 = vst.msk [vmem:[%s6] sm:$0xff] %vm2037, %v2036
    // Predicated region
    $region38: #{_lambda_.1} parent=1 // pred_check
      _
    $region39: #{_lambda_.1} parent=1 // pred_check_branch
      %2040 = sbr.rel (0) target = $region41
    $region40: #{_lambda_.1} parent=1 // pred_region
      _
    $region41: #{_lambda_.1} parent=1 // pred_fallthru
      _
    // Predicated region
    $region42: #{_lambda_.1} parent=1 // pred_check
      _
    $region43: #{_lambda_.1} parent=1 // pred_check_branch
      %2042 = sbr.rel (0) target = $region45
    $region44: #{_lambda_.1} parent=1 // pred_region
      _
    $region45: #{_lambda_.1} parent=1 // pred_fallthru
      _
    %2043 = vsyncpa [#allocation3], 1
    %2044 = vsyncpa [#allocation5], 1

</llo_original>
